<compile_context>
chip_gen: v5e
topology: v5e:2x2
jax: 0.10.0
libtpu: 0.0.40
codegen_flags: <defaults>
</compile_context>

<pallas_src>
import functools
import math

import jax
import jax.numpy as jnp
from jax.experimental import pallas as pl
from jax.experimental.pallas import tpu as pltpu

EPS = 1e-20        # Squash eps (matches the PyTorch module)
CW = 128           # lane width of the routing-coefficient slab (c), padded
NEG_BIG = -1e30    # pad value so padded lanes contribute exp(...) == 0


def _round_up(n, m):
    return ((n + m - 1) // m) * m


def _routing_caps_kernel(x_ref, w_ref, selz_ref, bc_ref, g_ref, consts_ref, o_ref,
                         *, N0, N1, D1):
    L = N1 * D1                    # 128 lanes per out-capsule slab
    inv_sqrt_d1 = 1.0 / math.sqrt(D1)

    x = x_ref[...]                                                  # (TB, N0*D0)

    # u[b, j*L + k*D1 + z] = sum_i x[b, j*D0+i] * W[k, j, i, z]
    # One block-diagonal MXU matmul: (TB, 128) x (128, 1024).
    u = jnp.dot(x, w_ref[...], preferred_element_type=jnp.float32)  # (TB, N0*L)

    # s_all[b, k*D1+z] = sum_j u[b, j, k, z]  — 128-lane-aligned slice adds.
    s_all = u[:, 0:L]
    for j in range(1, N0):
        s_all = s_all + u[:, j * L:(j + 1) * L]                      # (TB, L)

    # c_pre[b, k*N0+j] = sum_z u[b, j, k, z] * s_all[b, k, z]
    # (lane-block tile of s_all, elementwise mul, then selector matmul over z).
    v = u * jnp.concatenate([s_all] * N0, axis=1)                    # (TB, N0*L)
    c_pre = jnp.dot(v, selz_ref[...], preferred_element_type=jnp.float32)  # (TB, CW)

    # Scale and push the padding lanes (>= N0*N1) to -1e30 so they vanish below.
    c_w = c_pre * inv_sqrt_d1 + consts_ref[0:1, :]                   # (TB, CW)

    # Softmax over the out-capsule axis k.  Lane layout is q = k*N0 + j, so each
    # softmax group is the stride-N0 coset {q : q ≡ j (mod N0)} of the 128 lanes.
    # Tree max / tree sum with circular lane rolls (XLU) — exact per-group max.
    m = c_w
    sh = N0
    while sh < CW:
        m = jnp.maximum(m, pltpu.roll(m, shift=sh, axis=1))
        sh *= 2
    e = jnp.exp(c_w - m)                                             # pads -> 0
    den = e
    sh = N0
    while sh < CW:
        den = den + pltpu.roll(den, shift=sh, axis=1)
        sh *= 2
    c_soft = e / den
    c_fin = c_soft + consts_ref[1:2, :]                              # + b (padded)

    # s[b, k*D1+z] = sum_j u[b, j, k, z] * c_fin[b, k*N0+j]
    c_b = jnp.dot(c_fin, bc_ref[...], preferred_element_type=jnp.float32)  # (TB, N0*L)
    t = u * c_b
    s = t[:, 0:L]
    for j in range(1, N0):
        s = s + t[:, j * L:(j + 1) * L]                              # (TB, L)

    # Squash: per-out-capsule L2 norm broadcast across that capsule's D1 lanes
    # via a block-diagonal all-ones selector matmul (keeps everything 128-lane).
    nsq = jnp.dot(s * s, g_ref[...], preferred_element_type=jnp.float32)   # (TB, L)
    norm = jnp.sqrt(nsq)
    coef = 1.0 - pl.reciprocal(jnp.exp(norm) + EPS, approx=True)     # EUP
    unit = s * pl.reciprocal(norm + EPS, approx=True)                # EUP
    o_ref[...] = (coef * unit).astype(o_ref.dtype)


def pack_params(W, b):
    """One-time packing of parameters + constant selector matrices (hoisted out
    of the per-call path)."""
    N1, N0, D0, D1 = W.shape
    L = N1 * D1
    assert CW % N0 == 0 and N0 * N1 <= CW, "softmax coset trick needs N0 | 128, N0*N1 <= 128"

    # Block-diagonal transform: Wbd[j*D0+i, j*L + k*D1 + z] = W[k, j, i, z]
    Wt = jnp.transpose(W, (1, 2, 0, 3)).reshape(N0, D0, L)           # [j, i, k*D1+z]
    eye = jnp.eye(N0, dtype=jnp.float32)
    Wbd = jnp.einsum('jim,jl->jilm', Wt, eye).reshape(N0 * D0, N0 * L)

    # SelZ[j*L + k*D1 + z, k*N0 + j] = 1   (sum over z, output lane = k*N0+j)
    jj, kk, zz = jnp.meshgrid(jnp.arange(N0), jnp.arange(N1), jnp.arange(D1),
                              indexing='ij')
    rows = (jj * L + kk * D1 + zz).reshape(-1)
    cols = (kk * N0 + jj).reshape(-1)
    SelZ = jnp.zeros((N0 * L, CW), jnp.float32).at[rows, cols].set(1.0)
    # Bc[k*N0 + j, j*L + k*D1 + z] = 1  (broadcast routing coeffs back onto u's lanes)
    Bc = SelZ.T

    # Gnorm[k*D1+z, k'*D1+z'] = 1 iff k == k'  (per-capsule squared-norm broadcast)
    Gnorm = jnp.kron(jnp.eye(N1, dtype=jnp.float32), jnp.ones((D1, D1), jnp.float32))

    # Row 0: 0 on real lanes, -1e30 on pad lanes.  Row 1: bias b[k, j, 0] at lane k*N0+j.
    lane = jnp.arange(CW)
    pad_neg = jnp.where(lane < N0 * N1, 0.0, NEG_BIG).astype(jnp.float32)
    bias = jnp.zeros((CW,), jnp.float32).at[:N0 * N1].set(
        b[:, :, 0].astype(jnp.float32).reshape(-1))
    consts = jnp.stack([pad_neg, bias], axis=0)                      # (2, CW)

    return Wbd, SelZ, Bc, Gnorm, consts, (N0, D0, N1, D1)


def routing_caps_forward(x, packed, *, tb=256):
    Wbd, SelZ, Bc, Gnorm, consts, (N0, D0, N1, D1) = packed
    L = N1 * D1
    B = x.shape[0]

    # Lane-dense x: (B, N0*D0) = (B, 128).  Pad the batch to a multiple of TB.
    TB = min(tb, _round_up(B, 8))          # TB multiple of 8; 256 default (v6e/v7x MXU)
    Bp = _round_up(B, TB)
    x_flat = x.reshape(B, N0 * D0).astype(jnp.float32)
    if Bp != B:
        x_flat = jnp.pad(x_flat, ((0, Bp - B), (0, 0)))

    kernel = functools.partial(_routing_caps_kernel, N0=N0, N1=N1, D1=D1)
    out_flat = pl.pallas_call(
        kernel,
        out_shape=jax.ShapeDtypeStruct((Bp, L), jnp.float32),
        grid=(Bp // TB,),
        in_specs=[
            pl.BlockSpec((TB, N0 * D0), lambda i: (i, 0)),       # x (lane-dense)
            pl.BlockSpec((N0 * D0, N0 * L), lambda i: (0, 0)),   # block-diag W
            pl.BlockSpec((N0 * L, CW), lambda i: (0, 0)),        # SelZ
            pl.BlockSpec((CW, N0 * L), lambda i: (0, 0)),        # Bc
            pl.BlockSpec((L, L), lambda i: (0, 0)),              # Gnorm
            pl.BlockSpec((2, CW), lambda i: (0, 0)),             # pad / bias consts
        ],
        out_specs=pl.BlockSpec((TB, L), lambda i: (i, 0)),       # lane-dense output
        compiler_params=pltpu.CompilerParams(
            dimension_semantics=("parallel",),
            # Default scoped VMEM limit is ample for TB<=~1024; raise
            # vmem_limit_bytes here if TB is pushed to 2048+ (watch v7x's 64 MiB).
        ),
    )(x_flat, Wbd, SelZ, Bc, Gnorm, consts)

    return out_flat[:B].reshape(B, N1, D1)


def routing_caps_ref(x, W, b):
    """Pure-JAX mirror of the PyTorch forward, for verification."""
    D1 = W.shape[-1]
    hp = jax.lax.Precision.HIGHEST
    u = jnp.einsum('bji,kjiz->bkjz', x, W, precision=hp)
    c = jnp.einsum('bnij,bnkj->bni', u, u, precision=hp)
    c = c[..., None] / jnp.sqrt(jnp.float32(D1))
    c = jax.nn.softmax(c, axis=1) + b
    s = jnp.sum(u * c, axis=-2)
    norm = jnp.linalg.norm(s, ord=2, axis=-1, keepdims=True)
    coef = 1.0 - 1.0 / (jnp.exp(norm) + EPS)
    unit = s / (norm + EPS)
    return coef * unit


if __name__ == "__main__":
    B = 37              # deliberately not a multiple of 8 to exercise batch padding
    N0, D0 = 8, 16      # in_capsules  (N0 caps of dim D0)
    N1, D1 = 8, 16      # out_capsules (N1 caps of dim D1)

    key = jax.random.PRNGKey(0)
    kx, kw, kb = jax.random.split(key, 3)
    x = jax.random.normal(kx, (B, N0, D0), dtype=jnp.float32)
    # kaiming_normal_: gain=sqrt(2), fan_in = N0*D0*D1 for a (N1, N0, D0, D1) tensor
    std = (2.0 / (N0 * D0 * D1)) ** 0.5
    W = std * jax.random.normal(kw, (N1, N0, D0, D1), dtype=jnp.float32)
    # __init__ uses zeros for b; use small deterministic values to exercise the bias path
    b = 0.1 * jax.random.normal(kb, (N1, N0, 1), dtype=jnp.float32)

    packed = pack_params(W, b)                 # hoisted: once per parameter update
    out = jax.block_until_ready(routing_caps_forward(x, packed))
    ref = routing_caps_ref(x, W, b)

    assert out.shape == (B, N1, D1)
    max_err = float(jnp.max(jnp.abs(out - ref)))
    assert jnp.allclose(out, ref, atol=2e-3, rtol=2e-3), max_err
    print("KERNEL_OK")
</pallas_src>

<mosaic_0001>
module attributes {stable_mosaic.version = 11 : i64} {
  func.func @_routing_caps_kernel(%arg0: i32, %arg1: memref<40x128xf32, #tpu.memory_space<vmem>>, %arg2: memref<128x1024xf32, #tpu.memory_space<vmem>>, %arg3: memref<1024x128xf32, #tpu.memory_space<vmem>>, %arg4: memref<128x1024xf32, #tpu.memory_space<vmem>>, %arg5: memref<128x128xf32, #tpu.memory_space<vmem>>, %arg6: memref<2x128xf32, #tpu.memory_space<vmem>>, %arg7: memref<40x128xf32, #tpu.memory_space<vmem>>) attributes {dimension_semantics = [#tpu.dimension_semantics<parallel>], iteration_bounds = array<i64: 1>, scalar_prefetch = 0 : i64, scratch_operands = 0 : i64, tpu.core_type = #tpu.core_type<tc>, window_params = [{transform_indices = @transform_0, window_bounds = array<i64: 40, 128>}, {pipeline_mode = #tpu.pipeline_mode<synchronous>, transform_indices = @transform_1, window_bounds = array<i64: 128, 1024>}, {pipeline_mode = #tpu.pipeline_mode<synchronous>, transform_indices = @transform_2, window_bounds = array<i64: 1024, 128>}, {pipeline_mode = #tpu.pipeline_mode<synchronous>, transform_indices = @transform_3, window_bounds = array<i64: 128, 1024>}, {pipeline_mode = #tpu.pipeline_mode<synchronous>, transform_indices = @transform_4, window_bounds = array<i64: 128, 128>}, {pipeline_mode = #tpu.pipeline_mode<synchronous>, transform_indices = @transform_5, window_bounds = array<i64: 2, 128>}, {transform_indices = @transform_6, window_bounds = array<i64: 40, 128>}]} {
    %c0 = arith.constant 0 : index
    %c0_0 = arith.constant 0 : index
    %0 = vector.load %arg1[%c0, %c0_0] : memref<40x128xf32, #tpu.memory_space<vmem>>, vector<40x128xf32>
    %c0_1 = arith.constant 0 : index
    %c0_2 = arith.constant 0 : index
    %1 = vector.load %arg2[%c0_1, %c0_2] : memref<128x1024xf32, #tpu.memory_space<vmem>>, vector<128x1024xf32>
    %cst = arith.constant dense<0.000000e+00> : vector<40x1024xf32>
    %2 = tpu.matmul %0, %1, %cst {dimension_numbers = #tpu.dot_dimension_numbers<[1], [0], [0], [1], [0, 0, 1, 1], [], []>} : vector<40x128xf32>, vector<128x1024xf32>, vector<40x1024xf32> -> vector<40x1024xf32>
    %3 = vector.extract_strided_slice %2 {offsets = [0, 0], sizes = [40, 128], strides = [1, 1]} : vector<40x1024xf32> to vector<40x128xf32>
    %4 = vector.extract_strided_slice %2 {offsets = [0, 128], sizes = [40, 128], strides = [1, 1]} : vector<40x1024xf32> to vector<40x128xf32>
    %5 = arith.addf %3, %4 : vector<40x128xf32>
    %6 = vector.extract_strided_slice %2 {offsets = [0, 256], sizes = [40, 128], strides = [1, 1]} : vector<40x1024xf32> to vector<40x128xf32>
    %7 = arith.addf %5, %6 : vector<40x128xf32>
    %8 = vector.extract_strided_slice %2 {offsets = [0, 384], sizes = [40, 128], strides = [1, 1]} : vector<40x1024xf32> to vector<40x128xf32>
    %9 = arith.addf %7, %8 : vector<40x128xf32>
    %10 = vector.extract_strided_slice %2 {offsets = [0, 512], sizes = [40, 128], strides = [1, 1]} : vector<40x1024xf32> to vector<40x128xf32>
    %11 = arith.addf %9, %10 : vector<40x128xf32>
    %12 = vector.extract_strided_slice %2 {offsets = [0, 640], sizes = [40, 128], strides = [1, 1]} : vector<40x1024xf32> to vector<40x128xf32>
    %13 = arith.addf %11, %12 : vector<40x128xf32>
    %14 = vector.extract_strided_slice %2 {offsets = [0, 768], sizes = [40, 128], strides = [1, 1]} : vector<40x1024xf32> to vector<40x128xf32>
    %15 = arith.addf %13, %14 : vector<40x128xf32>
    %16 = vector.extract_strided_slice %2 {offsets = [0, 896], sizes = [40, 128], strides = [1, 1]} : vector<40x1024xf32> to vector<40x128xf32>
    %17 = arith.addf %15, %16 : vector<40x128xf32>
    %18 = tpu.concatenate %17, %17, %17, %17, %17, %17, %17, %17 in 1 : vector<40x128xf32>, vector<40x128xf32>, vector<40x128xf32>, vector<40x128xf32>, vector<40x128xf32>, vector<40x128xf32>, vector<40x128xf32>, vector<40x128xf32> -> vector<40x1024xf32>
    %19 = arith.mulf %2, %18 : vector<40x1024xf32>
    %c0_3 = arith.constant 0 : index
    %c0_4 = arith.constant 0 : index
    %20 = vector.load %arg3[%c0_3, %c0_4] : memref<1024x128xf32, #tpu.memory_space<vmem>>, vector<1024x128xf32>
    %cst_5 = arith.constant dense<0.000000e+00> : vector<40x128xf32>
    %21 = tpu.matmul %19, %20, %cst_5 {dimension_numbers = #tpu.dot_dimension_numbers<[1], [0], [0], [1], [0, 0, 1, 1], [], []>} : vector<40x1024xf32>, vector<1024x128xf32>, vector<40x128xf32> -> vector<40x128xf32>
    %cst_6 = arith.constant 2.500000e-01 : f32
    %22 = vector.broadcast %cst_6 : f32 to vector<40x128xf32>
    %23 = arith.mulf %21, %22 : vector<40x128xf32>
    %c0_7 = arith.constant 0 : index
    %c0_8 = arith.constant 0 : index
    %24 = vector.load %arg6[%c0_7, %c0_8] : memref<2x128xf32, #tpu.memory_space<vmem>>, vector<1x128xf32>
    %25 = vector.broadcast %24 : vector<1x128xf32> to vector<40x128xf32>
    %26 = arith.addf %23, %25 : vector<40x128xf32>
    %c8_i32 = arith.constant 8 : i32
    %27 = tpu.dynamic_rotate %26 by %c8_i32 dim 1 : vector<40x128xf32>, i32 -> vector<40x128xf32>
    %28 = arith.maximumf %26, %27 : vector<40x128xf32>
    %c16_i32 = arith.constant 16 : i32
    %29 = tpu.dynamic_rotate %28 by %c16_i32 dim 1 : vector<40x128xf32>, i32 -> vector<40x128xf32>
    %30 = arith.maximumf %28, %29 : vector<40x128xf32>
    %c32_i32 = arith.constant 32 : i32
    %31 = tpu.dynamic_rotate %30 by %c32_i32 dim 1 : vector<40x128xf32>, i32 -> vector<40x128xf32>
    %32 = arith.maximumf %30, %31 : vector<40x128xf32>
    %c64_i32 = arith.constant 64 : i32
    %33 = tpu.dynamic_rotate %32 by %c64_i32 dim 1 : vector<40x128xf32>, i32 -> vector<40x128xf32>
    %34 = arith.maximumf %32, %33 : vector<40x128xf32>
    %35 = arith.subf %26, %34 : vector<40x128xf32>
    %36 = math.exp %35 : vector<40x128xf32>
    %c8_i32_9 = arith.constant 8 : i32
    %37 = tpu.dynamic_rotate %36 by %c8_i32_9 dim 1 : vector<40x128xf32>, i32 -> vector<40x128xf32>
    %38 = arith.addf %36, %37 : vector<40x128xf32>
    %c16_i32_10 = arith.constant 16 : i32
    %39 = tpu.dynamic_rotate %38 by %c16_i32_10 dim 1 : vector<40x128xf32>, i32 -> vector<40x128xf32>
    %40 = arith.addf %38, %39 : vector<40x128xf32>
    %c32_i32_11 = arith.constant 32 : i32
    %41 = tpu.dynamic_rotate %40 by %c32_i32_11 dim 1 : vector<40x128xf32>, i32 -> vector<40x128xf32>
    %42 = arith.addf %40, %41 : vector<40x128xf32>
    %c64_i32_12 = arith.constant 64 : i32
    %43 = tpu.dynamic_rotate %42 by %c64_i32_12 dim 1 : vector<40x128xf32>, i32 -> vector<40x128xf32>
    %44 = arith.addf %42, %43 : vector<40x128xf32>
    %45 = arith.divf %36, %44 : vector<40x128xf32>
    %c1 = arith.constant 1 : index
    %c0_13 = arith.constant 0 : index
    %46 = vector.load %arg6[%c1, %c0_13] : memref<2x128xf32, #tpu.memory_space<vmem>>, vector<1x128xf32>
    %47 = vector.broadcast %46 : vector<1x128xf32> to vector<40x128xf32>
    %48 = arith.addf %45, %47 : vector<40x128xf32>
    %c0_14 = arith.constant 0 : index
    %c0_15 = arith.constant 0 : index
    %49 = vector.load %arg4[%c0_14, %c0_15] : memref<128x1024xf32, #tpu.memory_space<vmem>>, vector<128x1024xf32>
    %cst_16 = arith.constant dense<0.000000e+00> : vector<40x1024xf32>
    %50 = tpu.matmul %48, %49, %cst_16 {dimension_numbers = #tpu.dot_dimension_numbers<[1], [0], [0], [1], [0, 0, 1, 1], [], []>} : vector<40x128xf32>, vector<128x1024xf32>, vector<40x1024xf32> -> vector<40x1024xf32>
    %51 = arith.mulf %2, %50 : vector<40x1024xf32>
    %52 = vector.extract_strided_slice %51 {offsets = [0, 0], sizes = [40, 128], strides = [1, 1]} : vector<40x1024xf32> to vector<40x128xf32>
    %53 = vector.extract_strided_slice %51 {offsets = [0, 128], sizes = [40, 128], strides = [1, 1]} : vector<40x1024xf32> to vector<40x128xf32>
    %54 = arith.addf %52, %53 : vector<40x128xf32>
    %55 = vector.extract_strided_slice %51 {offsets = [0, 256], sizes = [40, 128], strides = [1, 1]} : vector<40x1024xf32> to vector<40x128xf32>
    %56 = arith.addf %54, %55 : vector<40x128xf32>
    %57 = vector.extract_strided_slice %51 {offsets = [0, 384], sizes = [40, 128], strides = [1, 1]} : vector<40x1024xf32> to vector<40x128xf32>
    %58 = arith.addf %56, %57 : vector<40x128xf32>
    %59 = vector.extract_strided_slice %51 {offsets = [0, 512], sizes = [40, 128], strides = [1, 1]} : vector<40x1024xf32> to vector<40x128xf32>
    %60 = arith.addf %58, %59 : vector<40x128xf32>
    %61 = vector.extract_strided_slice %51 {offsets = [0, 640], sizes = [40, 128], strides = [1, 1]} : vector<40x1024xf32> to vector<40x128xf32>
    %62 = arith.addf %60, %61 : vector<40x128xf32>
    %63 = vector.extract_strided_slice %51 {offsets = [0, 768], sizes = [40, 128], strides = [1, 1]} : vector<40x1024xf32> to vector<40x128xf32>
    %64 = arith.addf %62, %63 : vector<40x128xf32>
    %65 = vector.extract_strided_slice %51 {offsets = [0, 896], sizes = [40, 128], strides = [1, 1]} : vector<40x1024xf32> to vector<40x128xf32>
    %66 = arith.addf %64, %65 : vector<40x128xf32>
    %67 = arith.mulf %66, %66 : vector<40x128xf32>
    %c0_17 = arith.constant 0 : index
    %c0_18 = arith.constant 0 : index
    %68 = vector.load %arg5[%c0_17, %c0_18] : memref<128x128xf32, #tpu.memory_space<vmem>>, vector<128x128xf32>
    %cst_19 = arith.constant dense<0.000000e+00> : vector<40x128xf32>
    %69 = tpu.matmul %67, %68, %cst_19 {dimension_numbers = #tpu.dot_dimension_numbers<[1], [0], [0], [1], [0, 0, 1, 1], [], []>} : vector<40x128xf32>, vector<128x128xf32>, vector<40x128xf32> -> vector<40x128xf32>
    %70 = math.sqrt %69 : vector<40x128xf32>
    %71 = math.exp %70 : vector<40x128xf32>
    %cst_20 = arith.constant 9.99999968E-21 : f32
    %72 = vector.broadcast %cst_20 : f32 to vector<40x128xf32>
    %73 = arith.addf %71, %72 : vector<40x128xf32>
    %74 = tpu.reciprocal %73 {approx = true} : vector<40x128xf32> -> vector<40x128xf32>
    %cst_21 = arith.constant 1.000000e+00 : f32
    %75 = vector.broadcast %cst_21 : f32 to vector<40x128xf32>
    %76 = arith.subf %75, %74 : vector<40x128xf32>
    %cst_22 = arith.constant 9.99999968E-21 : f32
    %77 = vector.broadcast %cst_22 : f32 to vector<40x128xf32>
    %78 = arith.addf %70, %77 : vector<40x128xf32>
    %79 = tpu.reciprocal %78 {approx = true} : vector<40x128xf32> -> vector<40x128xf32>
    %80 = arith.mulf %66, %79 : vector<40x128xf32>
    %81 = arith.mulf %76, %80 : vector<40x128xf32>
    %c0_23 = arith.constant 0 : index
    %c0_24 = arith.constant 0 : index
    %82 = vector.load %arg7[%c0_23, %c0_24] : memref<40x128xf32, #tpu.memory_space<vmem>>, vector<40x128xf32>
    tpu.vector_store %arg7[%c0_23, %c0_24], %81 {strides = array<i32>} : memref<40x128xf32, #tpu.memory_space<vmem>>, vector<40x128xf32>,
    return
  }
  func.func @transform_0(%arg0: i32) -> (i32, i32) {
    %c0_i32 = arith.constant 0 : i32
    %c0_i32_0 = arith.constant 0 : i32
    return %arg0, %c0_i32 : i32, i32
  }
  func.func @transform_1(%arg0: i32) -> (i32, i32) {
    %c0_i32 = arith.constant 0 : i32
    %c0_i32_0 = arith.constant 0 : i32
    %c0_i32_1 = arith.constant 0 : i32
    return %c0_i32, %c0_i32_0 : i32, i32
  }
  func.func @transform_2(%arg0: i32) -> (i32, i32) {
    %c0_i32 = arith.constant 0 : i32
    %c0_i32_0 = arith.constant 0 : i32
    %c0_i32_1 = arith.constant 0 : i32
    return %c0_i32, %c0_i32_0 : i32, i32
  }
  func.func @transform_3(%arg0: i32) -> (i32, i32) {
    %c0_i32 = arith.constant 0 : i32
    %c0_i32_0 = arith.constant 0 : i32
    %c0_i32_1 = arith.constant 0 : i32
    return %c0_i32, %c0_i32_0 : i32, i32
  }
  func.func @transform_4(%arg0: i32) -> (i32, i32) {
    %c0_i32 = arith.constant 0 : i32
    %c0_i32_0 = arith.constant 0 : i32
    %c0_i32_1 = arith.constant 0 : i32
    return %c0_i32, %c0_i32_0 : i32, i32
  }
  func.func @transform_5(%arg0: i32) -> (i32, i32) {
    %c0_i32 = arith.constant 0 : i32
    %c0_i32_0 = arith.constant 0 : i32
    %c0_i32_1 = arith.constant 0 : i32
    return %c0_i32, %c0_i32_0 : i32, i32
  }
  func.func @transform_6(%arg0: i32) -> (i32, i32) {
    %c0_i32 = arith.constant 0 : i32
    %c0_i32_0 = arith.constant 0 : i32
    return %arg0, %c0_i32 : i32, i32
  }
}

</mosaic_0001>

<llo_original>
// kernel: tpu_custom_call.1
$region0: #{tpu_custom_call.1}
  #allocation0 [shape = 'u32[]', space=smem, size = 0x4, offset = 0x4, fixed_abs, tag = 'smem constant byte address 0x4 - core index']
  #allocation1 [shape = 'u32[72,128]{1,0:T(1,128)}', space=vmem, size = 0x9000, scoped, tag = 'internal scratch']
  %s0 = inlined_call_operand.hbm [shape: f32[40,128], index: 0, kind: input, shape index: {}]
  %s1 = inlined_call_operand.hbm [shape: f32[128,1024], index: 1, kind: input, shape index: {}]
  %s2 = inlined_call_operand.hbm [shape: f32[1024,128], index: 2, kind: input, shape index: {}]
  %s3 = inlined_call_operand.hbm [shape: f32[128,1024], index: 3, kind: input, shape index: {}]
  %s4 = inlined_call_operand.hbm [shape: f32[128,128], index: 4, kind: input, shape index: {}]
  %s5 = inlined_call_operand.vmem [shape: f32[2,128], index: 5, kind: input, shape index: {}]
  %s6 = inlined_call_operand.hbm [shape: f32[40,128], index: 6, kind: output, shape index: {}]
  %s7 = sld [smem:[#allocation0]]
  $region54: #{tpu_custom_call.1} parent=0
    _
  %s9 = ssub.s32 1, %s7
  %s10 = scalar_select 0, %s9, %s7
  $region1: #{tpu_custom_call.1} parent=0
    #allocation2 [shape = 'u8[20480]{0}', space=vmem, size = 0x5000, scoped, tag = 'input window, operand 0, single buffered']
    #allocation3 [shape = 's32[1]{0}', space=sflag, size = 0x4, scoped, tag = 'scoped memory for tpu_custom_call.1']
    #allocation4 [shape = 's32[1]{0}', space=sflag, size = 0x4, scoped, tag = 'scoped memory for tpu_custom_call.1']
    #allocation5 [shape = 'u8[524288]{0}', space=vmem, size = 0x80000, scoped, tag = 'input window, operand 1, single buffered']
    #allocation6 [shape = 's32[1]{0}', space=sflag, size = 0x4, scoped, tag = 'scoped memory for tpu_custom_call.1']
    #allocation7 [shape = 'u8[524288]{0}', space=vmem, size = 0x80000, scoped, tag = 'input window, operand 2, single buffered']
    #allocation8 [shape = 'u8[524288]{0}', space=vmem, size = 0x80000, scoped, tag = 'input window, operand 3, single buffered']
    #allocation9 [shape = 's32[1]{0}', space=sflag, size = 0x4, scoped, tag = 'scoped memory for tpu_custom_call.1']
    #allocation10 [shape = 'u8[65536]{0}', space=vmem, size = 0x10000, scoped, tag = 'input window, operand 4, single buffered']
    #allocation11 [shape = 'u8[20480]{0}', space=vmem, size = 0x5000, scoped, tag = 'output window, operand 0, single buffered']
    %11 = vsyncpa [#allocation3], 0
    %12 = vsyncpa [#allocation6], 0
    %13 = vsyncpa [#allocation9], 0
    %14 = vsyncpa [#allocation4], 0
    // Predicated region
    $region2: #{tpu_custom_call.1} parent=1 // pred_check
      _
    $region3: #{tpu_custom_call.1} parent=1 // pred_check_branch
      %16 = sbr.rel (0) target = $region5
    $region4: #{tpu_custom_call.1} parent=1 // pred_region
      %18 = vsyncadd [#allocation3], 0
      %s19 = sshll.u32 %s0, 4
      %s20 = int_to_ptr.hbm [resolvable:$true] %s19
      %s21 = sshll.u32 [#allocation2], 4
      %s22 = int_to_ptr.vmem [resolvable:$true] %s21
      %27 = dma.hbm_to_vmem [thread:$0]  %s20, 640, %s22, [#allocation3], 128, 128, 8
    $region5: #{tpu_custom_call.1} parent=1 // pred_fallthru
      _
    // Predicated region
    $region6: #{tpu_custom_call.1} parent=1 // pred_check
      _
    $region7: #{tpu_custom_call.1} parent=1 // pred_check_branch
      %29 = sbr.rel (0) target = $region9
    $region8: #{tpu_custom_call.1} parent=1 // pred_region
      %31 = vsyncadd [#allocation6], 0
      %s32 = sshll.u32 %s1, 4
      %s33 = int_to_ptr.hbm [resolvable:$true] %s32
      %s34 = sshll.u32 [#allocation5], 4
      %s35 = int_to_ptr.vmem [resolvable:$true] %s34
      %40 = dma.hbm_to_vmem [thread:$0]  %s33, 16384, %s35, [#allocation6], 1024, 1024, 64
    $region9: #{tpu_custom_call.1} parent=1 // pred_fallthru
      _
    // Predicated region
    $region10: #{tpu_custom_call.1} parent=1 // pred_check
      _
    $region11: #{tpu_custom_call.1} parent=1 // pred_check_branch
      %42 = sbr.rel (0) target = $region13
    $region12: #{tpu_custom_call.1} parent=1 // pred_region
      %44 = vsyncadd [#allocation6], 0
      %s45 = sshll.u32 %s2, 4
      %s46 = int_to_ptr.hbm [resolvable:$true] %s45
      %s47 = sshll.u32 [#allocation7], 4
      %s48 = int_to_ptr.vmem [resolvable:$true] %s47
      %53 = dma.hbm_to_vmem [thread:$0]  %s46, 16384, %s48, [#allocation6], 128, 128, 8
    $region13: #{tpu_custom_call.1} parent=1 // pred_fallthru
      _
    // Predicated region
    $region14: #{tpu_custom_call.1} parent=1 // pred_check
      _
    $region15: #{tpu_custom_call.1} parent=1 // pred_check_branch
      %55 = sbr.rel (0) target = $region17
    $region16: #{tpu_custom_call.1} parent=1 // pred_region
      %57 = vsyncadd [#allocation9], 0
      %s58 = sshll.u32 %s3, 4
      %s59 = int_to_ptr.hbm [resolvable:$true] %s58
      %s60 = sshll.u32 [#allocation8], 4
      %s61 = int_to_ptr.vmem [resolvable:$true] %s60
      %66 = dma.hbm_to_vmem [thread:$0]  %s59, 16384, %s61, [#allocation9], 1024, 1024, 64
    $region17: #{tpu_custom_call.1} parent=1 // pred_fallthru
      _
    // Predicated region
    $region18: #{tpu_custom_call.1} parent=1 // pred_check
      _
    $region19: #{tpu_custom_call.1} parent=1 // pred_check_branch
      %68 = sbr.rel (0) target = $region21
    $region20: #{tpu_custom_call.1} parent=1 // pred_region
      %70 = vsyncadd [#allocation9], 0
      %s71 = sshll.u32 %s4, 4
      %s72 = int_to_ptr.hbm [resolvable:$true] %s71
      %s73 = sshll.u32 [#allocation10], 4
      %s74 = int_to_ptr.vmem [resolvable:$true] %s73
      %79 = dma.hbm_to_vmem [thread:$0]  %s72, 2048, %s74, [#allocation9], 128, 128, 8
    $region21: #{tpu_custom_call.1} parent=1 // pred_fallthru
      _
    // Predicated region
    $region22: #{tpu_custom_call.1} parent=1 // pred_check
      _
    $region23: #{tpu_custom_call.1} parent=1 // pred_check_branch
      %81 = sbr.rel (0) target = $region25
    $region24: #{tpu_custom_call.1} parent=1 // pred_region
      _
    $region25: #{tpu_custom_call.1} parent=1 // pred_fallthru
      _
    // Predicated region
    $region26: #{tpu_custom_call.1} parent=1 // pred_check
      _
    $region27: #{tpu_custom_call.1} parent=1 // pred_check_branch
      %83 = sbr.rel (0) target = $region29
    $region28: #{tpu_custom_call.1} parent=1 // pred_region
      %85 = dma.done [#allocation3], 640
    $region29: #{tpu_custom_call.1} parent=1 // pred_fallthru
      _
    // Predicated region
    $region30: #{tpu_custom_call.1} parent=1 // pred_check
      _
    $region31: #{tpu_custom_call.1} parent=1 // pred_check_branch
      %87 = sbr.rel (0) target = $region33
    $region32: #{tpu_custom_call.1} parent=1 // pred_region
      %89 = dma.done [#allocation6], 16384
    $region33: #{tpu_custom_call.1} parent=1 // pred_fallthru
      _
    // Predicated region
    $region34: #{tpu_custom_call.1} parent=1 // pred_check
      _
    $region35: #{tpu_custom_call.1} parent=1 // pred_check_branch
      %91 = sbr.rel (0) target = $region37
    $region36: #{tpu_custom_call.1} parent=1 // pred_region
      %93 = dma.done [#allocation6], 16384
    $region37: #{tpu_custom_call.1} parent=1 // pred_fallthru
      _
    // Predicated region
    $region38: #{tpu_custom_call.1} parent=1 // pred_check
      _
    $region39: #{tpu_custom_call.1} parent=1 // pred_check_branch
      %95 = sbr.rel (0) target = $region41
    $region40: #{tpu_custom_call.1} parent=1 // pred_region
      %97 = dma.done [#allocation9], 16384
    $region41: #{tpu_custom_call.1} parent=1 // pred_fallthru
      _
    // Predicated region
    $region42: #{tpu_custom_call.1} parent=1 // pred_check
      _
    $region43: #{tpu_custom_call.1} parent=1 // pred_check_branch
      %99 = sbr.rel (0) target = $region45
    $region44: #{tpu_custom_call.1} parent=1 // pred_region
      %101 = dma.done [#allocation9], 2048
    $region45: #{tpu_custom_call.1} parent=1 // pred_fallthru
      _
    %v102 = vld [vmem:[#allocation2] sm:$0xff]
    %v103 = vld [vmem:[#allocation2 + $0x8] sm:$0xff]
    %v104 = vld [vmem:[#allocation2 + $0x10] sm:$0xff]
    %v105 = vld [vmem:[#allocation2 + $0x18] sm:$0xff]
    %v106 = vld [vmem:[#allocation2 + $0x20] sm:$0xff]
    %v107 = vld [vmem:[#allocation5] sm:$0xff]
    %v108 = vld [vmem:[#allocation5 + $0x8] sm:$0xff]
    %v109 = vld [vmem:[#allocation5 + $0x10] sm:$0xff]
    %v110 = vld [vmem:[#allocation5 + $0x18] sm:$0xff]
    %v111 = vld [vmem:[#allocation5 + $0x20] sm:$0xff]
    %v112 = vld [vmem:[#allocation5 + $0x28] sm:$0xff]
    %v113 = vld [vmem:[#allocation5 + $0x30] sm:$0xff]
    %v114 = vld [vmem:[#allocation5 + $0x38] sm:$0xff]
    %v115 = vld [vmem:[#allocation5 + $0x40] sm:$0xff]
    %v116 = vld [vmem:[#allocation5 + $0x48] sm:$0xff]
    %v117 = vld [vmem:[#allocation5 + $0x50] sm:$0xff]
    %v118 = vld [vmem:[#allocation5 + $0x58] sm:$0xff]
    %v119 = vld [vmem:[#allocation5 + $0x60] sm:$0xff]
    %v120 = vld [vmem:[#allocation5 + $0x68] sm:$0xff]
    %v121 = vld [vmem:[#allocation5 + $0x70] sm:$0xff]
    %v122 = vld [vmem:[#allocation5 + $0x78] sm:$0xff]
    %v123 = vld [vmem:[#allocation5 + $0x80] sm:$0xff]
    %v124 = vld [vmem:[#allocation5 + $0x88] sm:$0xff]
    %v125 = vld [vmem:[#allocation5 + $0x90] sm:$0xff]
    %v126 = vld [vmem:[#allocation5 + $0x98] sm:$0xff]
    %v127 = vld [vmem:[#allocation5 + $0xa0] sm:$0xff]
    %v128 = vld [vmem:[#allocation5 + $0xa8] sm:$0xff]
    %v129 = vld [vmem:[#allocation5 + $0xb0] sm:$0xff]
    %v130 = vld [vmem:[#allocation5 + $0xb8] sm:$0xff]
    %v131 = vld [vmem:[#allocation5 + $0xc0] sm:$0xff]
    %v132 = vld [vmem:[#allocation5 + $0xc8] sm:$0xff]
    %v133 = vld [vmem:[#allocation5 + $0xd0] sm:$0xff]
    %v134 = vld [vmem:[#allocation5 + $0xd8] sm:$0xff]
    %v135 = vld [vmem:[#allocation5 + $0xe0] sm:$0xff]
    %v136 = vld [vmem:[#allocation5 + $0xe8] sm:$0xff]
    %v137 = vld [vmem:[#allocation5 + $0xf0] sm:$0xff]
    %v138 = vld [vmem:[#allocation5 + $0xf8] sm:$0xff]
    %v139 = vld [vmem:[#allocation5 + $0x100] sm:$0xff]
    %v140 = vld [vmem:[#allocation5 + $0x108] sm:$0xff]
    %v141 = vld [vmem:[#allocation5 + $0x110] sm:$0xff]
    %v142 = vld [vmem:[#allocation5 + $0x118] sm:$0xff]
    %v143 = vld [vmem:[#allocation5 + $0x120] sm:$0xff]
    %v144 = vld [vmem:[#allocation5 + $0x128] sm:$0xff]
    %v145 = vld [vmem:[#allocation5 + $0x130] sm:$0xff]
    %v146 = vld [vmem:[#allocation5 + $0x138] sm:$0xff]
    %v147 = vld [vmem:[#allocation5 + $0x140] sm:$0xff]
    %v148 = vld [vmem:[#allocation5 + $0x148] sm:$0xff]
    %v149 = vld [vmem:[#allocation5 + $0x150] sm:$0xff]
    %v150 = vld [vmem:[#allocation5 + $0x158] sm:$0xff]
    %v151 = vld [vmem:[#allocation5 + $0x160] sm:$0xff]
    %v152 = vld [vmem:[#allocation5 + $0x168] sm:$0xff]
    %v153 = vld [vmem:[#allocation5 + $0x170] sm:$0xff]
    %v154 = vld [vmem:[#allocation5 + $0x178] sm:$0xff]
    %v155 = vld [vmem:[#allocation5 + $0x180] sm:$0xff]
    %v156 = vld [vmem:[#allocation5 + $0x188] sm:$0xff]
    %v157 = vld [vmem:[#allocation5 + $0x190] sm:$0xff]
    %v158 = vld [vmem:[#allocation5 + $0x198] sm:$0xff]
    %v159 = vld [vmem:[#allocation5 + $0x1a0] sm:$0xff]
    %v160 = vld [vmem:[#allocation5 + $0x1a8] sm:$0xff]
    %v161 = vld [vmem:[#allocation5 + $0x1b0] sm:$0xff]
    %v162 = vld [vmem:[#allocation5 + $0x1b8] sm:$0xff]
    %v163 = vld [vmem:[#allocation5 + $0x1c0] sm:$0xff]
    %v164 = vld [vmem:[#allocation5 + $0x1c8] sm:$0xff]
    %v165 = vld [vmem:[#allocation5 + $0x1d0] sm:$0xff]
    %v166 = vld [vmem:[#allocation5 + $0x1d8] sm:$0xff]
    %v167 = vld [vmem:[#allocation5 + $0x1e0] sm:$0xff]
    %v168 = vld [vmem:[#allocation5 + $0x1e8] sm:$0xff]
    %v169 = vld [vmem:[#allocation5 + $0x1f0] sm:$0xff]
    %v170 = vld [vmem:[#allocation5 + $0x1f8] sm:$0xff]
    %v171 = vld [vmem:[#allocation5 + $0x200] sm:$0xff]
    %v172 = vld [vmem:[#allocation5 + $0x208] sm:$0xff]
    %v173 = vld [vmem:[#allocation5 + $0x210] sm:$0xff]
    %v174 = vld [vmem:[#allocation5 + $0x218] sm:$0xff]
    %v175 = vld [vmem:[#allocation5 + $0x220] sm:$0xff]
    %v176 = vld [vmem:[#allocation5 + $0x228] sm:$0xff]
    %v177 = vld [vmem:[#allocation5 + $0x230] sm:$0xff]
    %v178 = vld [vmem:[#allocation5 + $0x238] sm:$0xff]
    %v179 = vld [vmem:[#allocation5 + $0x240] sm:$0xff]
    %v180 = vld [vmem:[#allocation5 + $0x248] sm:$0xff]
    %v181 = vld [vmem:[#allocation5 + $0x250] sm:$0xff]
    %v182 = vld [vmem:[#allocation5 + $0x258] sm:$0xff]
    %v183 = vld [vmem:[#allocation5 + $0x260] sm:$0xff]
    %v184 = vld [vmem:[#allocation5 + $0x268] sm:$0xff]
    %v185 = vld [vmem:[#allocation5 + $0x270] sm:$0xff]
    %v186 = vld [vmem:[#allocation5 + $0x278] sm:$0xff]
    %v187 = vld [vmem:[#allocation5 + $0x280] sm:$0xff]
    %v188 = vld [vmem:[#allocation5 + $0x288] sm:$0xff]
    %v189 = vld [vmem:[#allocation5 + $0x290] sm:$0xff]
    %v190 = vld [vmem:[#allocation5 + $0x298] sm:$0xff]
    %v191 = vld [vmem:[#allocation5 + $0x2a0] sm:$0xff]
    %v192 = vld [vmem:[#allocation5 + $0x2a8] sm:$0xff]
    %v193 = vld [vmem:[#allocation5 + $0x2b0] sm:$0xff]
    %v194 = vld [vmem:[#allocation5 + $0x2b8] sm:$0xff]
    %v195 = vld [vmem:[#allocation5 + $0x2c0] sm:$0xff]
    %v196 = vld [vmem:[#allocation5 + $0x2c8] sm:$0xff]
    %v197 = vld [vmem:[#allocation5 + $0x2d0] sm:$0xff]
    %v198 = vld [vmem:[#allocation5 + $0x2d8] sm:$0xff]
    %v199 = vld [vmem:[#allocation5 + $0x2e0] sm:$0xff]
    %v200 = vld [vmem:[#allocation5 + $0x2e8] sm:$0xff]
    %v201 = vld [vmem:[#allocation5 + $0x2f0] sm:$0xff]
    %v202 = vld [vmem:[#allocation5 + $0x2f8] sm:$0xff]
    %v203 = vld [vmem:[#allocation5 + $0x300] sm:$0xff]
    %v204 = vld [vmem:[#allocation5 + $0x308] sm:$0xff]
    %v205 = vld [vmem:[#allocation5 + $0x310] sm:$0xff]
    %v206 = vld [vmem:[#allocation5 + $0x318] sm:$0xff]
    %v207 = vld [vmem:[#allocation5 + $0x320] sm:$0xff]
    %v208 = vld [vmem:[#allocation5 + $0x328] sm:$0xff]
    %v209 = vld [vmem:[#allocation5 + $0x330] sm:$0xff]
    %v210 = vld [vmem:[#allocation5 + $0x338] sm:$0xff]
    %v211 = vld [vmem:[#allocation5 + $0x340] sm:$0xff]
    %v212 = vld [vmem:[#allocation5 + $0x348] sm:$0xff]
    %v213 = vld [vmem:[#allocation5 + $0x350] sm:$0xff]
    %v214 = vld [vmem:[#allocation5 + $0x358] sm:$0xff]
    %v215 = vld [vmem:[#allocation5 + $0x360] sm:$0xff]
    %v216 = vld [vmem:[#allocation5 + $0x368] sm:$0xff]
    %v217 = vld [vmem:[#allocation5 + $0x370] sm:$0xff]
    %v218 = vld [vmem:[#allocation5 + $0x378] sm:$0xff]
    %v219 = vld [vmem:[#allocation5 + $0x380] sm:$0xff]
    %v220 = vld [vmem:[#allocation5 + $0x388] sm:$0xff]
    %v221 = vld [vmem:[#allocation5 + $0x390] sm:$0xff]
    %v222 = vld [vmem:[#allocation5 + $0x398] sm:$0xff]
    %v223 = vld [vmem:[#allocation5 + $0x3a0] sm:$0xff]
    %v224 = vld [vmem:[#allocation5 + $0x3a8] sm:$0xff]
    %v225 = vld [vmem:[#allocation5 + $0x3b0] sm:$0xff]
    %v226 = vld [vmem:[#allocation5 + $0x3b8] sm:$0xff]
    %v227 = vld [vmem:[#allocation5 + $0x3c0] sm:$0xff]
    %v228 = vld [vmem:[#allocation5 + $0x3c8] sm:$0xff]
    %v229 = vld [vmem:[#allocation5 + $0x3d0] sm:$0xff]
    %v230 = vld [vmem:[#allocation5 + $0x3d8] sm:$0xff]
    %v231 = vld [vmem:[#allocation5 + $0x3e0] sm:$0xff]
    %v232 = vld [vmem:[#allocation5 + $0x3e8] sm:$0xff]
    %v233 = vld [vmem:[#allocation5 + $0x3f0] sm:$0xff]
    %v234 = vld [vmem:[#allocation5 + $0x3f8] sm:$0xff]
    %235 = vmatpush.msra.mxu0 %v227
    %236 = vmatpush.msra.mxu0 %v219
    %237 = vmatpush.msra.mxu0 %v211
    %238 = vmatpush.msra.mxu0 %v203
    %239 = vmatpush.msra.mxu0 %v195
    %240 = vmatpush.msra.mxu0 %v187
    %241 = vmatpush.msra.mxu0 %v179
    %242 = vmatpush.msra.mxu0 %v171
    %243 = vmatpush.msra.mxu0 %v163
    %244 = vmatpush.msra.mxu0 %v155
    %245 = vmatpush.msra.mxu0 %v147
    %246 = vmatpush.msra.mxu0 %v139
    %247 = vmatpush.msra.mxu0 %v131
    %248 = vmatpush.msra.mxu0 %v123
    %249 = vmatpush.msra.mxu0 %v115
    %250 = vmatpush.msra.mxu0 %v107
    %251 = vmatmul.f32.gmra.mxu0 %v102
    %v252 = vpop.f32.mrf.mxu0
    %v253 = vadd.f32 0.0, %v252
    %254 = vmatmul.f32.gmra.mxu0 %v103
    %v255 = vpop.f32.mrf.mxu0
    %v256 = vadd.f32 0.0, %v255
    %257 = vmatmul.f32.gmra.mxu0 %v104
    %v258 = vpop.f32.mrf.mxu0
    %v259 = vadd.f32 0.0, %v258
    %260 = vmatmul.f32.gmra.mxu0 %v105
    %v261 = vpop.f32.mrf.mxu0
    %v262 = vadd.f32 0.0, %v261
    %263 = vmatmul.f32.gmra.mxu0 %v106
    %v264 = vpop.f32.mrf.mxu0
    %v265 = vadd.f32 0.0, %v264
    %266 = vdwg.mxu0
    %267 = vmatpush.msra.mxu0 %v228
    %268 = vmatpush.msra.mxu0 %v220
    %269 = vmatpush.msra.mxu0 %v212
    %270 = vmatpush.msra.mxu0 %v204
    %271 = vmatpush.msra.mxu0 %v196
    %272 = vmatpush.msra.mxu0 %v188
    %273 = vmatpush.msra.mxu0 %v180
    %274 = vmatpush.msra.mxu0 %v172
    %275 = vmatpush.msra.mxu0 %v164
    %276 = vmatpush.msra.mxu0 %v156
    %277 = vmatpush.msra.mxu0 %v148
    %278 = vmatpush.msra.mxu0 %v140
    %279 = vmatpush.msra.mxu0 %v132
    %280 = vmatpush.msra.mxu0 %v124
    %281 = vmatpush.msra.mxu0 %v116
    %282 = vmatpush.msra.mxu0 %v108
    %283 = vmatmul.f32.gmra.mxu0 %v102
    %v284 = vpop.f32.mrf.mxu0
    %v285 = vadd.f32 0.0, %v284
    %286 = vmatmul.f32.gmra.mxu0 %v103
    %v287 = vpop.f32.mrf.mxu0
    %v288 = vadd.f32 0.0, %v287
    %289 = vmatmul.f32.gmra.mxu0 %v104
    %v290 = vpop.f32.mrf.mxu0
    %v291 = vadd.f32 0.0, %v290
    %292 = vmatmul.f32.gmra.mxu0 %v105
    %v293 = vpop.f32.mrf.mxu0
    %v294 = vadd.f32 0.0, %v293
    %295 = vmatmul.f32.gmra.mxu0 %v106
    %v296 = vpop.f32.mrf.mxu0
    %v297 = vadd.f32 0.0, %v296
    %298 = vdwg.mxu0
    %299 = vmatpush.msra.mxu0 %v229
    %300 = vmatpush.msra.mxu0 %v221
    %301 = vmatpush.msra.mxu0 %v213
    %302 = vmatpush.msra.mxu0 %v205
    %303 = vmatpush.msra.mxu0 %v197
    %304 = vmatpush.msra.mxu0 %v189
    %305 = vmatpush.msra.mxu0 %v181
    %306 = vmatpush.msra.mxu0 %v173
    %307 = vmatpush.msra.mxu0 %v165
    %308 = vmatpush.msra.mxu0 %v157
    %309 = vmatpush.msra.mxu0 %v149
    %310 = vmatpush.msra.mxu0 %v141
    %311 = vmatpush.msra.mxu0 %v133
    %312 = vmatpush.msra.mxu0 %v125
    %313 = vmatpush.msra.mxu0 %v117
    %314 = vmatpush.msra.mxu0 %v109
    %315 = vmatmul.f32.gmra.mxu0 %v102
    %v316 = vpop.f32.mrf.mxu0
    %v317 = vadd.f32 0.0, %v316
    %318 = vmatmul.f32.gmra.mxu0 %v103
    %v319 = vpop.f32.mrf.mxu0
    %v320 = vadd.f32 0.0, %v319
    %321 = vmatmul.f32.gmra.mxu0 %v104
    %v322 = vpop.f32.mrf.mxu0
    %v323 = vadd.f32 0.0, %v322
    %324 = vmatmul.f32.gmra.mxu0 %v105
    %v325 = vpop.f32.mrf.mxu0
    %v326 = vadd.f32 0.0, %v325
    %327 = vmatmul.f32.gmra.mxu0 %v106
    %v328 = vpop.f32.mrf.mxu0
    %v329 = vadd.f32 0.0, %v328
    %330 = vdwg.mxu0
    %331 = vmatpush.msra.mxu0 %v230
    %332 = vmatpush.msra.mxu0 %v222
    %333 = vmatpush.msra.mxu0 %v214
    %334 = vmatpush.msra.mxu0 %v206
    %335 = vmatpush.msra.mxu0 %v198
    %336 = vmatpush.msra.mxu0 %v190
    %337 = vmatpush.msra.mxu0 %v182
    %338 = vmatpush.msra.mxu0 %v174
    %339 = vmatpush.msra.mxu0 %v166
    %340 = vmatpush.msra.mxu0 %v158
    %341 = vmatpush.msra.mxu0 %v150
    %342 = vmatpush.msra.mxu0 %v142
    %343 = vmatpush.msra.mxu0 %v134
    %344 = vmatpush.msra.mxu0 %v126
    %345 = vmatpush.msra.mxu0 %v118
    %346 = vmatpush.msra.mxu0 %v110
    %347 = vmatmul.f32.gmra.mxu0 %v102
    %v348 = vpop.f32.mrf.mxu0
    %v349 = vadd.f32 0.0, %v348
    %350 = vmatmul.f32.gmra.mxu0 %v103
    %v351 = vpop.f32.mrf.mxu0
    %v352 = vadd.f32 0.0, %v351
    %353 = vmatmul.f32.gmra.mxu0 %v104
    %v354 = vpop.f32.mrf.mxu0
    %v355 = vadd.f32 0.0, %v354
    %356 = vmatmul.f32.gmra.mxu0 %v105
    %v357 = vpop.f32.mrf.mxu0
    %v358 = vadd.f32 0.0, %v357
    %359 = vmatmul.f32.gmra.mxu0 %v106
    %v360 = vpop.f32.mrf.mxu0
    %v361 = vadd.f32 0.0, %v360
    %362 = vdwg.mxu0
    %363 = vmatpush.msra.mxu0 %v231
    %364 = vmatpush.msra.mxu0 %v223
    %365 = vmatpush.msra.mxu0 %v215
    %366 = vmatpush.msra.mxu0 %v207
    %367 = vmatpush.msra.mxu0 %v199
    %368 = vmatpush.msra.mxu0 %v191
    %369 = vmatpush.msra.mxu0 %v183
    %370 = vmatpush.msra.mxu0 %v175
    %371 = vmatpush.msra.mxu0 %v167
    %372 = vmatpush.msra.mxu0 %v159
    %373 = vmatpush.msra.mxu0 %v151
    %374 = vmatpush.msra.mxu0 %v143
    %375 = vmatpush.msra.mxu0 %v135
    %376 = vmatpush.msra.mxu0 %v127
    %377 = vmatpush.msra.mxu0 %v119
    %378 = vmatpush.msra.mxu0 %v111
    %379 = vmatmul.f32.gmra.mxu0 %v102
    %v380 = vpop.f32.mrf.mxu0
    %v381 = vadd.f32 0.0, %v380
    %382 = vmatmul.f32.gmra.mxu0 %v103
    %v383 = vpop.f32.mrf.mxu0
    %v384 = vadd.f32 0.0, %v383
    %385 = vmatmul.f32.gmra.mxu0 %v104
    %v386 = vpop.f32.mrf.mxu0
    %v387 = vadd.f32 0.0, %v386
    %388 = vmatmul.f32.gmra.mxu0 %v105
    %v389 = vpop.f32.mrf.mxu0
    %v390 = vadd.f32 0.0, %v389
    %391 = vmatmul.f32.gmra.mxu0 %v106
    %v392 = vpop.f32.mrf.mxu0
    %v393 = vadd.f32 0.0, %v392
    %394 = vdwg.mxu0
    %395 = vmatpush.msra.mxu0 %v232
    %396 = vmatpush.msra.mxu0 %v224
    %397 = vmatpush.msra.mxu0 %v216
    %398 = vmatpush.msra.mxu0 %v208
    %399 = vmatpush.msra.mxu0 %v200
    %400 = vmatpush.msra.mxu0 %v192
    %401 = vmatpush.msra.mxu0 %v184
    %402 = vmatpush.msra.mxu0 %v176
    %403 = vmatpush.msra.mxu0 %v168
    %404 = vmatpush.msra.mxu0 %v160
    %405 = vmatpush.msra.mxu0 %v152
    %406 = vmatpush.msra.mxu0 %v144
    %407 = vmatpush.msra.mxu0 %v136
    %408 = vmatpush.msra.mxu0 %v128
    %409 = vmatpush.msra.mxu0 %v120
    %410 = vmatpush.msra.mxu0 %v112
    %411 = vmatmul.f32.gmra.mxu0 %v102
    %v412 = vpop.f32.mrf.mxu0
    %v413 = vadd.f32 0.0, %v412
    %414 = vmatmul.f32.gmra.mxu0 %v103
    %v415 = vpop.f32.mrf.mxu0
    %v416 = vadd.f32 0.0, %v415
    %417 = vmatmul.f32.gmra.mxu0 %v104
    %v418 = vpop.f32.mrf.mxu0
    %v419 = vadd.f32 0.0, %v418
    %420 = vmatmul.f32.gmra.mxu0 %v105
    %v421 = vpop.f32.mrf.mxu0
    %v422 = vadd.f32 0.0, %v421
    %423 = vmatmul.f32.gmra.mxu0 %v106
    %v424 = vpop.f32.mrf.mxu0
    %v425 = vadd.f32 0.0, %v424
    %426 = vdwg.mxu0
    %427 = vmatpush.msra.mxu0 %v233
    %428 = vmatpush.msra.mxu0 %v225
    %429 = vmatpush.msra.mxu0 %v217
    %430 = vmatpush.msra.mxu0 %v209
    %431 = vmatpush.msra.mxu0 %v201
    %432 = vmatpush.msra.mxu0 %v193
    %433 = vmatpush.msra.mxu0 %v185
    %434 = vmatpush.msra.mxu0 %v177
    %435 = vmatpush.msra.mxu0 %v169
    %436 = vmatpush.msra.mxu0 %v161
    %437 = vmatpush.msra.mxu0 %v153
    %438 = vmatpush.msra.mxu0 %v145
    %439 = vmatpush.msra.mxu0 %v137
    %440 = vmatpush.msra.mxu0 %v129
    %441 = vmatpush.msra.mxu0 %v121
    %442 = vmatpush.msra.mxu0 %v113
    %443 = vmatmul.f32.gmra.mxu0 %v102
    %v444 = vpop.f32.mrf.mxu0
    %v445 = vadd.f32 0.0, %v444
    %446 = vmatmul.f32.gmra.mxu0 %v103
    %v447 = vpop.f32.mrf.mxu0
    %v448 = vadd.f32 0.0, %v447
    %449 = vmatmul.f32.gmra.mxu0 %v104
    %v450 = vpop.f32.mrf.mxu0
    %v451 = vadd.f32 0.0, %v450
    %452 = vmatmul.f32.gmra.mxu0 %v105
    %v453 = vpop.f32.mrf.mxu0
    %v454 = vadd.f32 0.0, %v453
    %455 = vmatmul.f32.gmra.mxu0 %v106
    %v456 = vpop.f32.mrf.mxu0
    %v457 = vadd.f32 0.0, %v456
    %458 = vdwg.mxu0
    %459 = vmatpush.msra.mxu0 %v234
    %460 = vmatpush.msra.mxu0 %v226
    %461 = vmatpush.msra.mxu0 %v218
    %462 = vmatpush.msra.mxu0 %v210
    %463 = vmatpush.msra.mxu0 %v202
    %464 = vmatpush.msra.mxu0 %v194
    %465 = vmatpush.msra.mxu0 %v186
    %466 = vmatpush.msra.mxu0 %v178
    %467 = vmatpush.msra.mxu0 %v170
    %468 = vmatpush.msra.mxu0 %v162
    %469 = vmatpush.msra.mxu0 %v154
    %470 = vmatpush.msra.mxu0 %v146
    %471 = vmatpush.msra.mxu0 %v138
    %472 = vmatpush.msra.mxu0 %v130
    %473 = vmatpush.msra.mxu0 %v122
    %474 = vmatpush.msra.mxu0 %v114
    %475 = vmatmul.f32.gmra.mxu0 %v102
    %v476 = vpop.f32.mrf.mxu0
    %v477 = vadd.f32 0.0, %v476
    %478 = vmatmul.f32.gmra.mxu0 %v103
    %v479 = vpop.f32.mrf.mxu0
    %v480 = vadd.f32 0.0, %v479
    %481 = vmatmul.f32.gmra.mxu0 %v104
    %v482 = vpop.f32.mrf.mxu0
    %v483 = vadd.f32 0.0, %v482
    %484 = vmatmul.f32.gmra.mxu0 %v105
    %v485 = vpop.f32.mrf.mxu0
    %v486 = vadd.f32 0.0, %v485
    %487 = vmatmul.f32.gmra.mxu0 %v106
    %v488 = vpop.f32.mrf.mxu0
    %v489 = vadd.f32 0.0, %v488
    %490 = vdwg.mxu0
    %v491 = vadd.f32 %v253, %v285
    %v492 = vadd.f32 %v256, %v288
    %v493 = vadd.f32 %v259, %v291
    %v494 = vadd.f32 %v262, %v294
    %v495 = vadd.f32 %v265, %v297
    %v496 = vadd.f32 %v491, %v317
    %v497 = vadd.f32 %v492, %v320
    %v498 = vadd.f32 %v493, %v323
    %v499 = vadd.f32 %v494, %v326
    %v500 = vadd.f32 %v495, %v329
    %v501 = vadd.f32 %v496, %v349
    %v502 = vadd.f32 %v497, %v352
    %v503 = vadd.f32 %v498, %v355
    %v504 = vadd.f32 %v499, %v358
    %v505 = vadd.f32 %v500, %v361
    %v506 = vadd.f32 %v501, %v381
    %v507 = vadd.f32 %v502, %v384
    %v508 = vadd.f32 %v503, %v387
    %v509 = vadd.f32 %v504, %v390
    %v510 = vadd.f32 %v505, %v393
    %v511 = vadd.f32 %v506, %v413
    %v512 = vadd.f32 %v507, %v416
    %v513 = vadd.f32 %v508, %v419
    %v514 = vadd.f32 %v509, %v422
    %v515 = vadd.f32 %v510, %v425
    %v516 = vadd.f32 %v511, %v445
    %v517 = vadd.f32 %v512, %v448
    %v518 = vadd.f32 %v513, %v451
    %v519 = vadd.f32 %v514, %v454
    %v520 = vadd.f32 %v515, %v457
    %v521 = vadd.f32 %v516, %v477
    %v522 = vadd.f32 %v517, %v480
    %v523 = vadd.f32 %v518, %v483
    %v524 = vadd.f32 %v519, %v486
    %v525 = vadd.f32 %v520, %v489
    %v526 = vmul.f32 %v253, %v521
    %v527 = vmul.f32 %v285, %v521
    %v528 = vmul.f32 %v317, %v521
    %v529 = vmul.f32 %v349, %v521
    %v530 = vmul.f32 %v381, %v521
    %v531 = vmul.f32 %v413, %v521
    %v532 = vmul.f32 %v445, %v521
    %v533 = vmul.f32 %v477, %v521
    %v534 = vmul.f32 %v256, %v522
    %v535 = vmul.f32 %v288, %v522
    %v536 = vmul.f32 %v320, %v522
    %v537 = vmul.f32 %v352, %v522
    %v538 = vmul.f32 %v384, %v522
    %v539 = vmul.f32 %v416, %v522
    %v540 = vmul.f32 %v448, %v522
    %v541 = vmul.f32 %v480, %v522
    %v542 = vmul.f32 %v259, %v523
    %v543 = vmul.f32 %v291, %v523
    %v544 = vmul.f32 %v323, %v523
    %v545 = vmul.f32 %v355, %v523
    %v546 = vmul.f32 %v387, %v523
    %v547 = vmul.f32 %v419, %v523
    %v548 = vmul.f32 %v451, %v523
    %v549 = vmul.f32 %v483, %v523
    %v550 = vmul.f32 %v262, %v524
    %v551 = vmul.f32 %v294, %v524
    %v552 = vmul.f32 %v326, %v524
    %v553 = vmul.f32 %v358, %v524
    %v554 = vmul.f32 %v390, %v524
    %v555 = vmul.f32 %v422, %v524
    %v556 = vmul.f32 %v454, %v524
    %v557 = vmul.f32 %v486, %v524
    %v558 = vmul.f32 %v265, %v525
    %v559 = vmul.f32 %v297, %v525
    %v560 = vmul.f32 %v329, %v525
    %v561 = vmul.f32 %v361, %v525
    %v562 = vmul.f32 %v393, %v525
    %v563 = vmul.f32 %v425, %v525
    %v564 = vmul.f32 %v457, %v525
    %v565 = vmul.f32 %v489, %v525
    %v566 = vld [vmem:[#allocation7] sm:$0xff]
    %v567 = vld [vmem:[#allocation7 + $0x8] sm:$0xff]
    %v568 = vld [vmem:[#allocation7 + $0x10] sm:$0xff]
    %v569 = vld [vmem:[#allocation7 + $0x18] sm:$0xff]
    %v570 = vld [vmem:[#allocation7 + $0x20] sm:$0xff]
    %v571 = vld [vmem:[#allocation7 + $0x28] sm:$0xff]
    %v572 = vld [vmem:[#allocation7 + $0x30] sm:$0xff]
    %v573 = vld [vmem:[#allocation7 + $0x38] sm:$0xff]
    %v574 = vld [vmem:[#allocation7 + $0x40] sm:$0xff]
    %v575 = vld [vmem:[#allocation7 + $0x48] sm:$0xff]
    %v576 = vld [vmem:[#allocation7 + $0x50] sm:$0xff]
    %v577 = vld [vmem:[#allocation7 + $0x58] sm:$0xff]
    %v578 = vld [vmem:[#allocation7 + $0x60] sm:$0xff]
    %v579 = vld [vmem:[#allocation7 + $0x68] sm:$0xff]
    %v580 = vld [vmem:[#allocation7 + $0x70] sm:$0xff]
    %v581 = vld [vmem:[#allocation7 + $0x78] sm:$0xff]
    %v582 = vld [vmem:[#allocation7 + $0x80] sm:$0xff]
    %v583 = vld [vmem:[#allocation7 + $0x88] sm:$0xff]
    %v584 = vld [vmem:[#allocation7 + $0x90] sm:$0xff]
    %v585 = vld [vmem:[#allocation7 + $0x98] sm:$0xff]
    %v586 = vld [vmem:[#allocation7 + $0xa0] sm:$0xff]
    %v587 = vld [vmem:[#allocation7 + $0xa8] sm:$0xff]
    %v588 = vld [vmem:[#allocation7 + $0xb0] sm:$0xff]
    %v589 = vld [vmem:[#allocation7 + $0xb8] sm:$0xff]
    %v590 = vld [vmem:[#allocation7 + $0xc0] sm:$0xff]
    %v591 = vld [vmem:[#allocation7 + $0xc8] sm:$0xff]
    %v592 = vld [vmem:[#allocation7 + $0xd0] sm:$0xff]
    %v593 = vld [vmem:[#allocation7 + $0xd8] sm:$0xff]
    %v594 = vld [vmem:[#allocation7 + $0xe0] sm:$0xff]
    %v595 = vld [vmem:[#allocation7 + $0xe8] sm:$0xff]
    %v596 = vld [vmem:[#allocation7 + $0xf0] sm:$0xff]
    %v597 = vld [vmem:[#allocation7 + $0xf8] sm:$0xff]
    %v598 = vld [vmem:[#allocation7 + $0x100] sm:$0xff]
    %v599 = vld [vmem:[#allocation7 + $0x108] sm:$0xff]
    %v600 = vld [vmem:[#allocation7 + $0x110] sm:$0xff]
    %v601 = vld [vmem:[#allocation7 + $0x118] sm:$0xff]
    %v602 = vld [vmem:[#allocation7 + $0x120] sm:$0xff]
    %v603 = vld [vmem:[#allocation7 + $0x128] sm:$0xff]
    %v604 = vld [vmem:[#allocation7 + $0x130] sm:$0xff]
    %v605 = vld [vmem:[#allocation7 + $0x138] sm:$0xff]
    %v606 = vld [vmem:[#allocation7 + $0x140] sm:$0xff]
    %v607 = vld [vmem:[#allocation7 + $0x148] sm:$0xff]
    %v608 = vld [vmem:[#allocation7 + $0x150] sm:$0xff]
    %v609 = vld [vmem:[#allocation7 + $0x158] sm:$0xff]
    %v610 = vld [vmem:[#allocation7 + $0x160] sm:$0xff]
    %v611 = vld [vmem:[#allocation7 + $0x168] sm:$0xff]
    %v612 = vld [vmem:[#allocation7 + $0x170] sm:$0xff]
    %v613 = vld [vmem:[#allocation7 + $0x178] sm:$0xff]
    %v614 = vld [vmem:[#allocation7 + $0x180] sm:$0xff]
    %v615 = vld [vmem:[#allocation7 + $0x188] sm:$0xff]
    %v616 = vld [vmem:[#allocation7 + $0x190] sm:$0xff]
    %v617 = vld [vmem:[#allocation7 + $0x198] sm:$0xff]
    %v618 = vld [vmem:[#allocation7 + $0x1a0] sm:$0xff]
    %v619 = vld [vmem:[#allocation7 + $0x1a8] sm:$0xff]
    %v620 = vld [vmem:[#allocation7 + $0x1b0] sm:$0xff]
    %v621 = vld [vmem:[#allocation7 + $0x1b8] sm:$0xff]
    %v622 = vld [vmem:[#allocation7 + $0x1c0] sm:$0xff]
    %v623 = vld [vmem:[#allocation7 + $0x1c8] sm:$0xff]
    %v624 = vld [vmem:[#allocation7 + $0x1d0] sm:$0xff]
    %v625 = vld [vmem:[#allocation7 + $0x1d8] sm:$0xff]
    %v626 = vld [vmem:[#allocation7 + $0x1e0] sm:$0xff]
    %v627 = vld [vmem:[#allocation7 + $0x1e8] sm:$0xff]
    %v628 = vld [vmem:[#allocation7 + $0x1f0] sm:$0xff]
    %v629 = vld [vmem:[#allocation7 + $0x1f8] sm:$0xff]
    %v630 = vld [vmem:[#allocation7 + $0x200] sm:$0xff]
    %v631 = vld [vmem:[#allocation7 + $0x208] sm:$0xff]
    %v632 = vld [vmem:[#allocation7 + $0x210] sm:$0xff]
    %v633 = vld [vmem:[#allocation7 + $0x218] sm:$0xff]
    %v634 = vld [vmem:[#allocation7 + $0x220] sm:$0xff]
    %v635 = vld [vmem:[#allocation7 + $0x228] sm:$0xff]
    %v636 = vld [vmem:[#allocation7 + $0x230] sm:$0xff]
    %v637 = vld [vmem:[#allocation7 + $0x238] sm:$0xff]
    %v638 = vld [vmem:[#allocation7 + $0x240] sm:$0xff]
    %v639 = vld [vmem:[#allocation7 + $0x248] sm:$0xff]
    %v640 = vld [vmem:[#allocation7 + $0x250] sm:$0xff]
    %v641 = vld [vmem:[#allocation7 + $0x258] sm:$0xff]
    %v642 = vld [vmem:[#allocation7 + $0x260] sm:$0xff]
    %v643 = vld [vmem:[#allocation7 + $0x268] sm:$0xff]
    %v644 = vld [vmem:[#allocation7 + $0x270] sm:$0xff]
    %v645 = vld [vmem:[#allocation7 + $0x278] sm:$0xff]
    %v646 = vld [vmem:[#allocation7 + $0x280] sm:$0xff]
    %v647 = vld [vmem:[#allocation7 + $0x288] sm:$0xff]
    %v648 = vld [vmem:[#allocation7 + $0x290] sm:$0xff]
    %v649 = vld [vmem:[#allocation7 + $0x298] sm:$0xff]
    %v650 = vld [vmem:[#allocation7 + $0x2a0] sm:$0xff]
    %v651 = vld [vmem:[#allocation7 + $0x2a8] sm:$0xff]
    %v652 = vld [vmem:[#allocation7 + $0x2b0] sm:$0xff]
    %v653 = vld [vmem:[#allocation7 + $0x2b8] sm:$0xff]
    %v654 = vld [vmem:[#allocation7 + $0x2c0] sm:$0xff]
    %v655 = vld [vmem:[#allocation7 + $0x2c8] sm:$0xff]
    %v656 = vld [vmem:[#allocation7 + $0x2d0] sm:$0xff]
    %v657 = vld [vmem:[#allocation7 + $0x2d8] sm:$0xff]
    %v658 = vld [vmem:[#allocation7 + $0x2e0] sm:$0xff]
    %v659 = vld [vmem:[#allocation7 + $0x2e8] sm:$0xff]
    %v660 = vld [vmem:[#allocation7 + $0x2f0] sm:$0xff]
    %v661 = vld [vmem:[#allocation7 + $0x2f8] sm:$0xff]
    %v662 = vld [vmem:[#allocation7 + $0x300] sm:$0xff]
    %v663 = vld [vmem:[#allocation7 + $0x308] sm:$0xff]
    %v664 = vld [vmem:[#allocation7 + $0x310] sm:$0xff]
    %v665 = vld [vmem:[#allocation7 + $0x318] sm:$0xff]
    %v666 = vld [vmem:[#allocation7 + $0x320] sm:$0xff]
    %v667 = vld [vmem:[#allocation7 + $0x328] sm:$0xff]
    %v668 = vld [vmem:[#allocation7 + $0x330] sm:$0xff]
    %v669 = vld [vmem:[#allocation7 + $0x338] sm:$0xff]
    %v670 = vld [vmem:[#allocation7 + $0x340] sm:$0xff]
    %v671 = vld [vmem:[#allocation7 + $0x348] sm:$0xff]
    %v672 = vld [vmem:[#allocation7 + $0x350] sm:$0xff]
    %v673 = vld [vmem:[#allocation7 + $0x358] sm:$0xff]
    %v674 = vld [vmem:[#allocation7 + $0x360] sm:$0xff]
    %v675 = vld [vmem:[#allocation7 + $0x368] sm:$0xff]
    %v676 = vld [vmem:[#allocation7 + $0x370] sm:$0xff]
    %v677 = vld [vmem:[#allocation7 + $0x378] sm:$0xff]
    %v678 = vld [vmem:[#allocation7 + $0x380] sm:$0xff]
    %v679 = vld [vmem:[#allocation7 + $0x388] sm:$0xff]
    %v680 = vld [vmem:[#allocation7 + $0x390] sm:$0xff]
    %v681 = vld [vmem:[#allocation7 + $0x398] sm:$0xff]
    %v682 = vld [vmem:[#allocation7 + $0x3a0] sm:$0xff]
    %v683 = vld [vmem:[#allocation7 + $0x3a8] sm:$0xff]
    %v684 = vld [vmem:[#allocation7 + $0x3b0] sm:$0xff]
    %v685 = vld [vmem:[#allocation7 + $0x3b8] sm:$0xff]
    %v686 = vld [vmem:[#allocation7 + $0x3c0] sm:$0xff]
    %v687 = vld [vmem:[#allocation7 + $0x3c8] sm:$0xff]
    %v688 = vld [vmem:[#allocation7 + $0x3d0] sm:$0xff]
    %v689 = vld [vmem:[#allocation7 + $0x3d8] sm:$0xff]
    %v690 = vld [vmem:[#allocation7 + $0x3e0] sm:$0xff]
    %v691 = vld [vmem:[#allocation7 + $0x3e8] sm:$0xff]
    %v692 = vld [vmem:[#allocation7 + $0x3f0] sm:$0xff]
    %v693 = vld [vmem:[#allocation7 + $0x3f8] sm:$0xff]
    %694 = vmatpush.msra.mxu0 %v581
    %695 = vmatpush.msra.mxu0 %v580
    %696 = vmatpush.msra.mxu0 %v579
    %697 = vmatpush.msra.mxu0 %v578
    %698 = vmatpush.msra.mxu0 %v577
    %699 = vmatpush.msra.mxu0 %v576
    %700 = vmatpush.msra.mxu0 %v575
    %701 = vmatpush.msra.mxu0 %v574
    %702 = vmatpush.msra.mxu0 %v573
    %703 = vmatpush.msra.mxu0 %v572
    %704 = vmatpush.msra.mxu0 %v571
    %705 = vmatpush.msra.mxu0 %v570
    %706 = vmatpush.msra.mxu0 %v569
    %707 = vmatpush.msra.mxu0 %v568
    %708 = vmatpush.msra.mxu0 %v567
    %709 = vmatpush.msra.mxu0 %v566
    %710 = vmatmul.f32.gmra.mxu0 %v526
    %v711 = vpop.f32.mrf.mxu0
    %v712 = vadd.f32 0.0, %v711
    %713 = vmatmul.f32.gmra.mxu0 %v534
    %v714 = vpop.f32.mrf.mxu0
    %v715 = vadd.f32 0.0, %v714
    %716 = vmatmul.f32.gmra.mxu0 %v542
    %v717 = vpop.f32.mrf.mxu0
    %v718 = vadd.f32 0.0, %v717
    %719 = vmatmul.f32.gmra.mxu0 %v550
    %v720 = vpop.f32.mrf.mxu0
    %v721 = vadd.f32 0.0, %v720
    %722 = vmatmul.f32.gmra.mxu0 %v558
    %v723 = vpop.f32.mrf.mxu0
    %v724 = vadd.f32 0.0, %v723
    %725 = vdwg.mxu0
    %726 = vmatpush.msra.mxu0 %v597
    %727 = vmatpush.msra.mxu0 %v596
    %728 = vmatpush.msra.mxu0 %v595
    %729 = vmatpush.msra.mxu0 %v594
    %730 = vmatpush.msra.mxu0 %v593
    %731 = vmatpush.msra.mxu0 %v592
    %732 = vmatpush.msra.mxu0 %v591
    %733 = vmatpush.msra.mxu0 %v590
    %734 = vmatpush.msra.mxu0 %v589
    %735 = vmatpush.msra.mxu0 %v588
    %736 = vmatpush.msra.mxu0 %v587
    %737 = vmatpush.msra.mxu0 %v586
    %738 = vmatpush.msra.mxu0 %v585
    %739 = vmatpush.msra.mxu0 %v584
    %740 = vmatpush.msra.mxu0 %v583
    %741 = vmatpush.msra.mxu0 %v582
    %742 = vmatmul.f32.gmra.mxu0 %v527
    %v743 = vpop.f32.mrf.mxu0
    %v744 = vadd.f32 %v712, %v743
    %745 = vmatmul.f32.gmra.mxu0 %v535
    %v746 = vpop.f32.mrf.mxu0
    %v747 = vadd.f32 %v715, %v746
    %748 = vmatmul.f32.gmra.mxu0 %v543
    %v749 = vpop.f32.mrf.mxu0
    %v750 = vadd.f32 %v718, %v749
    %751 = vmatmul.f32.gmra.mxu0 %v551
    %v752 = vpop.f32.mrf.mxu0
    %v753 = vadd.f32 %v721, %v752
    %754 = vmatmul.f32.gmra.mxu0 %v559
    %v755 = vpop.f32.mrf.mxu0
    %v756 = vadd.f32 %v724, %v755
    %757 = vdwg.mxu0
    %758 = vmatpush.msra.mxu0 %v613
    %759 = vmatpush.msra.mxu0 %v612
    %760 = vmatpush.msra.mxu0 %v611
    %761 = vmatpush.msra.mxu0 %v610
    %762 = vmatpush.msra.mxu0 %v609
    %763 = vmatpush.msra.mxu0 %v608
    %764 = vmatpush.msra.mxu0 %v607
    %765 = vmatpush.msra.mxu0 %v606
    %766 = vmatpush.msra.mxu0 %v605
    %767 = vmatpush.msra.mxu0 %v604
    %768 = vmatpush.msra.mxu0 %v603
    %769 = vmatpush.msra.mxu0 %v602
    %770 = vmatpush.msra.mxu0 %v601
    %771 = vmatpush.msra.mxu0 %v600
    %772 = vmatpush.msra.mxu0 %v599
    %773 = vmatpush.msra.mxu0 %v598
    %774 = vmatmul.f32.gmra.mxu0 %v528
    %v775 = vpop.f32.mrf.mxu0
    %v776 = vadd.f32 %v744, %v775
    %777 = vmatmul.f32.gmra.mxu0 %v536
    %v778 = vpop.f32.mrf.mxu0
    %v779 = vadd.f32 %v747, %v778
    %780 = vmatmul.f32.gmra.mxu0 %v544
    %v781 = vpop.f32.mrf.mxu0
    %v782 = vadd.f32 %v750, %v781
    %783 = vmatmul.f32.gmra.mxu0 %v552
    %v784 = vpop.f32.mrf.mxu0
    %v785 = vadd.f32 %v753, %v784
    %786 = vmatmul.f32.gmra.mxu0 %v560
    %v787 = vpop.f32.mrf.mxu0
    %v788 = vadd.f32 %v756, %v787
    %789 = vdwg.mxu0
    %790 = vmatpush.msra.mxu0 %v629
    %791 = vmatpush.msra.mxu0 %v628
    %792 = vmatpush.msra.mxu0 %v627
    %793 = vmatpush.msra.mxu0 %v626
    %794 = vmatpush.msra.mxu0 %v625
    %795 = vmatpush.msra.mxu0 %v624
    %796 = vmatpush.msra.mxu0 %v623
    %797 = vmatpush.msra.mxu0 %v622
    %798 = vmatpush.msra.mxu0 %v621
    %799 = vmatpush.msra.mxu0 %v620
    %800 = vmatpush.msra.mxu0 %v619
    %801 = vmatpush.msra.mxu0 %v618
    %802 = vmatpush.msra.mxu0 %v617
    %803 = vmatpush.msra.mxu0 %v616
    %804 = vmatpush.msra.mxu0 %v615
    %805 = vmatpush.msra.mxu0 %v614
    %806 = vmatmul.f32.gmra.mxu0 %v529
    %v807 = vpop.f32.mrf.mxu0
    %v808 = vadd.f32 %v776, %v807
    %809 = vmatmul.f32.gmra.mxu0 %v537
    %v810 = vpop.f32.mrf.mxu0
    %v811 = vadd.f32 %v779, %v810
    %812 = vmatmul.f32.gmra.mxu0 %v545
    %v813 = vpop.f32.mrf.mxu0
    %v814 = vadd.f32 %v782, %v813
    %815 = vmatmul.f32.gmra.mxu0 %v553
    %v816 = vpop.f32.mrf.mxu0
    %v817 = vadd.f32 %v785, %v816
    %818 = vmatmul.f32.gmra.mxu0 %v561
    %v819 = vpop.f32.mrf.mxu0
    %v820 = vadd.f32 %v788, %v819
    %821 = vdwg.mxu0
    %822 = vmatpush.msra.mxu0 %v645
    %823 = vmatpush.msra.mxu0 %v644
    %824 = vmatpush.msra.mxu0 %v643
    %825 = vmatpush.msra.mxu0 %v642
    %826 = vmatpush.msra.mxu0 %v641
    %827 = vmatpush.msra.mxu0 %v640
    %828 = vmatpush.msra.mxu0 %v639
    %829 = vmatpush.msra.mxu0 %v638
    %830 = vmatpush.msra.mxu0 %v637
    %831 = vmatpush.msra.mxu0 %v636
    %832 = vmatpush.msra.mxu0 %v635
    %833 = vmatpush.msra.mxu0 %v634
    %834 = vmatpush.msra.mxu0 %v633
    %835 = vmatpush.msra.mxu0 %v632
    %836 = vmatpush.msra.mxu0 %v631
    %837 = vmatpush.msra.mxu0 %v630
    %838 = vmatmul.f32.gmra.mxu0 %v530
    %v839 = vpop.f32.mrf.mxu0
    %v840 = vadd.f32 %v808, %v839
    %841 = vmatmul.f32.gmra.mxu0 %v538
    %v842 = vpop.f32.mrf.mxu0
    %v843 = vadd.f32 %v811, %v842
    %844 = vmatmul.f32.gmra.mxu0 %v546
    %v845 = vpop.f32.mrf.mxu0
    %v846 = vadd.f32 %v814, %v845
    %847 = vmatmul.f32.gmra.mxu0 %v554
    %v848 = vpop.f32.mrf.mxu0
    %v849 = vadd.f32 %v817, %v848
    %850 = vmatmul.f32.gmra.mxu0 %v562
    %v851 = vpop.f32.mrf.mxu0
    %v852 = vadd.f32 %v820, %v851
    %853 = vdwg.mxu0
    %854 = vmatpush.msra.mxu0 %v661
    %855 = vmatpush.msra.mxu0 %v660
    %856 = vmatpush.msra.mxu0 %v659
    %857 = vmatpush.msra.mxu0 %v658
    %858 = vmatpush.msra.mxu0 %v657
    %859 = vmatpush.msra.mxu0 %v656
    %860 = vmatpush.msra.mxu0 %v655
    %861 = vmatpush.msra.mxu0 %v654
    %862 = vmatpush.msra.mxu0 %v653
    %863 = vmatpush.msra.mxu0 %v652
    %864 = vmatpush.msra.mxu0 %v651
    %865 = vmatpush.msra.mxu0 %v650
    %866 = vmatpush.msra.mxu0 %v649
    %867 = vmatpush.msra.mxu0 %v648
    %868 = vmatpush.msra.mxu0 %v647
    %869 = vmatpush.msra.mxu0 %v646
    %870 = vmatmul.f32.gmra.mxu0 %v531
    %v871 = vpop.f32.mrf.mxu0
    %v872 = vadd.f32 %v840, %v871
    %873 = vmatmul.f32.gmra.mxu0 %v539
    %v874 = vpop.f32.mrf.mxu0
    %v875 = vadd.f32 %v843, %v874
    %876 = vmatmul.f32.gmra.mxu0 %v547
    %v877 = vpop.f32.mrf.mxu0
    %v878 = vadd.f32 %v846, %v877
    %879 = vmatmul.f32.gmra.mxu0 %v555
    %v880 = vpop.f32.mrf.mxu0
    %v881 = vadd.f32 %v849, %v880
    %882 = vmatmul.f32.gmra.mxu0 %v563
    %v883 = vpop.f32.mrf.mxu0
    %v884 = vadd.f32 %v852, %v883
    %885 = vdwg.mxu0
    %886 = vmatpush.msra.mxu0 %v677
    %887 = vmatpush.msra.mxu0 %v676
    %888 = vmatpush.msra.mxu0 %v675
    %889 = vmatpush.msra.mxu0 %v674
    %890 = vmatpush.msra.mxu0 %v673
    %891 = vmatpush.msra.mxu0 %v672
    %892 = vmatpush.msra.mxu0 %v671
    %893 = vmatpush.msra.mxu0 %v670
    %894 = vmatpush.msra.mxu0 %v669
    %895 = vmatpush.msra.mxu0 %v668
    %896 = vmatpush.msra.mxu0 %v667
    %897 = vmatpush.msra.mxu0 %v666
    %898 = vmatpush.msra.mxu0 %v665
    %899 = vmatpush.msra.mxu0 %v664
    %900 = vmatpush.msra.mxu0 %v663
    %901 = vmatpush.msra.mxu0 %v662
    %902 = vmatmul.f32.gmra.mxu0 %v532
    %v903 = vpop.f32.mrf.mxu0
    %v904 = vadd.f32 %v872, %v903
    %905 = vmatmul.f32.gmra.mxu0 %v540
    %v906 = vpop.f32.mrf.mxu0
    %v907 = vadd.f32 %v875, %v906
    %908 = vmatmul.f32.gmra.mxu0 %v548
    %v909 = vpop.f32.mrf.mxu0
    %v910 = vadd.f32 %v878, %v909
    %911 = vmatmul.f32.gmra.mxu0 %v556
    %v912 = vpop.f32.mrf.mxu0
    %v913 = vadd.f32 %v881, %v912
    %914 = vmatmul.f32.gmra.mxu0 %v564
    %v915 = vpop.f32.mrf.mxu0
    %v916 = vadd.f32 %v884, %v915
    %917 = vdwg.mxu0
    %918 = vmatpush.msra.mxu0 %v693
    %919 = vmatpush.msra.mxu0 %v692
    %920 = vmatpush.msra.mxu0 %v691
    %921 = vmatpush.msra.mxu0 %v690
    %922 = vmatpush.msra.mxu0 %v689
    %923 = vmatpush.msra.mxu0 %v688
    %924 = vmatpush.msra.mxu0 %v687
    %925 = vmatpush.msra.mxu0 %v686
    %926 = vmatpush.msra.mxu0 %v685
    %927 = vmatpush.msra.mxu0 %v684
    %928 = vmatpush.msra.mxu0 %v683
    %929 = vmatpush.msra.mxu0 %v682
    %930 = vmatpush.msra.mxu0 %v681
    %931 = vmatpush.msra.mxu0 %v680
    %932 = vmatpush.msra.mxu0 %v679
    %933 = vmatpush.msra.mxu0 %v678
    %934 = vmatmul.f32.gmra.mxu0 %v533
    %v935 = vpop.f32.mrf.mxu0
    %v936 = vadd.f32 %v904, %v935
    %937 = vmatmul.f32.gmra.mxu0 %v541
    %v938 = vpop.f32.mrf.mxu0
    %v939 = vadd.f32 %v907, %v938
    %940 = vmatmul.f32.gmra.mxu0 %v549
    %v941 = vpop.f32.mrf.mxu0
    %v942 = vadd.f32 %v910, %v941
    %943 = vmatmul.f32.gmra.mxu0 %v557
    %v944 = vpop.f32.mrf.mxu0
    %v945 = vadd.f32 %v913, %v944
    %946 = vmatmul.f32.gmra.mxu0 %v565
    %v947 = vpop.f32.mrf.mxu0
    %v948 = vadd.f32 %v916, %v947
    %949 = vdwg.mxu0
    %v950 = vmul.f32 %v936, 0.25
    %v951 = vmul.f32 %v939, 0.25
    %v952 = vmul.f32 %v942, 0.25
    %v953 = vmul.f32 %v945, 0.25
    %v954 = vmul.f32 %v948, 0.25
    %v955 = vld [vmem:[%s5] sm:$0x1]
    %v956 = vperm.slane %v955, 0
    %v957 = vadd.f32 %v950, %v956
    %v958 = vadd.f32 %v951, %v956
    %v959 = vadd.f32 %v952, %v956
    %v960 = vadd.f32 %v953, %v956
    %v961 = vadd.f32 %v954, %v956
    %962 = vrot.lane.b32.xlu0 %v957, 8
    %v963 = vpop.permute.xlu0 %962
    %964 = vrot.lane.b32.xlu0 %v958, 8
    %v965 = vpop.permute.xlu0 %964
    %966 = vrot.lane.b32.xlu0 %v959, 8
    %v967 = vpop.permute.xlu0 %966
    %968 = vrot.lane.b32.xlu0 %v960, 8
    %v969 = vpop.permute.xlu0 %968
    %970 = vrot.lane.b32.xlu0 %v961, 8
    %v971 = vpop.permute.xlu0 %970
    %v972 = vmax.f32 %v957, %v963
    %v973 = vmax.f32 %v958, %v965
    %v974 = vmax.f32 %v959, %v967
    %v975 = vmax.f32 %v960, %v969
    %v976 = vmax.f32 %v961, %v971
    %977 = vrot.lane.b32.xlu0 %v972, 16
    %v978 = vpop.permute.xlu0 %977
    %979 = vrot.lane.b32.xlu0 %v973, 16
    %v980 = vpop.permute.xlu0 %979
    %981 = vrot.lane.b32.xlu0 %v974, 16
    %v982 = vpop.permute.xlu0 %981
    %983 = vrot.lane.b32.xlu0 %v975, 16
    %v984 = vpop.permute.xlu0 %983
    %985 = vrot.lane.b32.xlu0 %v976, 16
    %v986 = vpop.permute.xlu0 %985
    %v987 = vmax.f32 %v972, %v978
    %v988 = vmax.f32 %v973, %v980
    %v989 = vmax.f32 %v974, %v982
    %v990 = vmax.f32 %v975, %v984
    %v991 = vmax.f32 %v976, %v986
    %992 = vrot.lane.b32.xlu0 %v987, 32
    %v993 = vpop.permute.xlu0 %992
    %994 = vrot.lane.b32.xlu0 %v988, 32
    %v995 = vpop.permute.xlu0 %994
    %996 = vrot.lane.b32.xlu0 %v989, 32
    %v997 = vpop.permute.xlu0 %996
    %998 = vrot.lane.b32.xlu0 %v990, 32
    %v999 = vpop.permute.xlu0 %998
    %1000 = vrot.lane.b32.xlu0 %v991, 32
    %v1001 = vpop.permute.xlu0 %1000
    %v1002 = vmax.f32 %v987, %v993
    %v1003 = vmax.f32 %v988, %v995
    %v1004 = vmax.f32 %v989, %v997
    %v1005 = vmax.f32 %v990, %v999
    %v1006 = vmax.f32 %v991, %v1001
    %1007 = vrot.lane.b32.xlu0 %v1002, 64
    %v1008 = vpop.permute.xlu0 %1007
    %1009 = vrot.lane.b32.xlu0 %v1003, 64
    %v1010 = vpop.permute.xlu0 %1009
    %1011 = vrot.lane.b32.xlu0 %v1004, 64
    %v1012 = vpop.permute.xlu0 %1011
    %1013 = vrot.lane.b32.xlu0 %v1005, 64
    %v1014 = vpop.permute.xlu0 %1013
    %1015 = vrot.lane.b32.xlu0 %v1006, 64
    %v1016 = vpop.permute.xlu0 %1015
    %v1017 = vmax.f32 %v1002, %v1008
    %v1018 = vmax.f32 %v1003, %v1010
    %v1019 = vmax.f32 %v1004, %v1012
    %v1020 = vmax.f32 %v1005, %v1014
    %v1021 = vmax.f32 %v1006, %v1016
    %v1022 = vsub.f32 %v957, %v1017
    %v1023 = vsub.f32 %v958, %v1018
    %v1024 = vsub.f32 %v959, %v1019
    %v1025 = vsub.f32 %v960, %v1020
    %v1026 = vsub.f32 %v961, %v1021
    %v1027 = vmul.f32 %v1022, 1.442695
    %v1028 = vpow.pop %v1027
    %v1029 = vmul.f32 %v1023, 1.442695
    %v1030 = vpow.pop %v1029
    %v1031 = vmul.f32 %v1024, 1.442695
    %v1032 = vpow.pop %v1031
    %v1033 = vmul.f32 %v1025, 1.442695
    %v1034 = vpow.pop %v1033
    %v1035 = vmul.f32 %v1026, 1.442695
    %v1036 = vpow.pop %v1035
    %1037 = vrot.lane.b32.xlu0 %v1028, 8
    %v1038 = vpop.permute.xlu0 %1037
    %1039 = vrot.lane.b32.xlu0 %v1030, 8
    %v1040 = vpop.permute.xlu0 %1039
    %1041 = vrot.lane.b32.xlu0 %v1032, 8
    %v1042 = vpop.permute.xlu0 %1041
    %1043 = vrot.lane.b32.xlu0 %v1034, 8
    %v1044 = vpop.permute.xlu0 %1043
    %1045 = vrot.lane.b32.xlu0 %v1036, 8
    %v1046 = vpop.permute.xlu0 %1045
    %v1047 = vadd.f32 %v1028, %v1038
    %v1048 = vadd.f32 %v1030, %v1040
    %v1049 = vadd.f32 %v1032, %v1042
    %v1050 = vadd.f32 %v1034, %v1044
    %v1051 = vadd.f32 %v1036, %v1046
    %1052 = vrot.lane.b32.xlu0 %v1047, 16
    %v1053 = vpop.permute.xlu0 %1052
    %1054 = vrot.lane.b32.xlu0 %v1048, 16
    %v1055 = vpop.permute.xlu0 %1054
    %1056 = vrot.lane.b32.xlu0 %v1049, 16
    %v1057 = vpop.permute.xlu0 %1056
    %1058 = vrot.lane.b32.xlu0 %v1050, 16
    %v1059 = vpop.permute.xlu0 %1058
    %1060 = vrot.lane.b32.xlu0 %v1051, 16
    %v1061 = vpop.permute.xlu0 %1060
    %v1062 = vadd.f32 %v1047, %v1053
    %v1063 = vadd.f32 %v1048, %v1055
    %v1064 = vadd.f32 %v1049, %v1057
    %v1065 = vadd.f32 %v1050, %v1059
    %v1066 = vadd.f32 %v1051, %v1061
    %1067 = vrot.lane.b32.xlu0 %v1062, 32
    %v1068 = vpop.permute.xlu0 %1067
    %1069 = vrot.lane.b32.xlu0 %v1063, 32
    %v1070 = vpop.permute.xlu0 %1069
    %1071 = vrot.lane.b32.xlu0 %v1064, 32
    %v1072 = vpop.permute.xlu0 %1071
    %1073 = vrot.lane.b32.xlu0 %v1065, 32
    %v1074 = vpop.permute.xlu0 %1073
    %1075 = vrot.lane.b32.xlu0 %v1066, 32
    %v1076 = vpop.permute.xlu0 %1075
    %v1077 = vadd.f32 %v1062, %v1068
    %v1078 = vadd.f32 %v1063, %v1070
    %v1079 = vadd.f32 %v1064, %v1072
    %v1080 = vadd.f32 %v1065, %v1074
    %v1081 = vadd.f32 %v1066, %v1076
    %1082 = vrot.lane.b32.xlu0 %v1077, 64
    %v1083 = vpop.permute.xlu0 %1082
    %1084 = vrot.lane.b32.xlu0 %v1078, 64
    %v1085 = vpop.permute.xlu0 %1084
    %1086 = vrot.lane.b32.xlu0 %v1079, 64
    %v1087 = vpop.permute.xlu0 %1086
    %1088 = vrot.lane.b32.xlu0 %v1080, 64
    %v1089 = vpop.permute.xlu0 %1088
    %1090 = vrot.lane.b32.xlu0 %v1081, 64
    %v1091 = vpop.permute.xlu0 %1090
    %v1092 = vadd.f32 %v1077, %v1083
    %v1093 = vadd.f32 %v1078, %v1085
    %v1094 = vadd.f32 %v1079, %v1087
    %v1095 = vadd.f32 %v1080, %v1089
    %v1096 = vadd.f32 %v1081, %v1091
    %v1097 = vrcp.pop %v1092
    %v1098 = vmul.f32 %v1092, %v1097
    %v1099 = vsub.f32 1.0, %v1098
    %v1100 = vmul.f32 %v1097, %v1099
    %v1101 = vadd.f32 %v1097, %v1100
    %vm1102 = vweird.f32 %v1092
    %vm1103 = vweird.f32 %v1097
    %vm1104 = vmor %vm1102, %vm1103
    %v1105 = vsel %vm1104, %v1097, %v1101
    %v1106 = vand.u32 2147483647, %v1092
    %vm1107 = vcmp.eq.f32.partialorder %v1106, 8.507059e+37
    %v1108 = vand.u32 %v1092, 2147483648
    %v1109 = vor.u32 1.1754944e-38, %v1108
    %v1110 = vsel %vm1107, %v1109, %v1105
    %v1111 = vmul.f32 %v1028, %v1110
    %v1112 = vrcp.pop %v1093
    %v1113 = vmul.f32 %v1093, %v1112
    %v1114 = vsub.f32 1.0, %v1113
    %v1115 = vmul.f32 %v1112, %v1114
    %v1116 = vadd.f32 %v1112, %v1115
    %vm1117 = vweird.f32 %v1093
    %vm1118 = vweird.f32 %v1112
    %vm1119 = vmor %vm1117, %vm1118
    %v1120 = vsel %vm1119, %v1112, %v1116
    %v1121 = vand.u32 2147483647, %v1093
    %vm1122 = vcmp.eq.f32.partialorder %v1121, 8.507059e+37
    %v1123 = vand.u32 %v1093, 2147483648
    %v1124 = vor.u32 1.1754944e-38, %v1123
    %v1125 = vsel %vm1122, %v1124, %v1120
    %v1126 = vmul.f32 %v1030, %v1125
    %v1127 = vrcp.pop %v1094
    %v1128 = vmul.f32 %v1094, %v1127
    %v1129 = vsub.f32 1.0, %v1128
    %v1130 = vmul.f32 %v1127, %v1129
    %v1131 = vadd.f32 %v1127, %v1130
    %vm1132 = vweird.f32 %v1094
    %vm1133 = vweird.f32 %v1127
    %vm1134 = vmor %vm1132, %vm1133
    %v1135 = vsel %vm1134, %v1127, %v1131
    %v1136 = vand.u32 2147483647, %v1094
    %vm1137 = vcmp.eq.f32.partialorder %v1136, 8.507059e+37
    %v1138 = vand.u32 %v1094, 2147483648
    %v1139 = vor.u32 1.1754944e-38, %v1138
    %v1140 = vsel %vm1137, %v1139, %v1135
    %v1141 = vmul.f32 %v1032, %v1140
    %v1142 = vrcp.pop %v1095
    %v1143 = vmul.f32 %v1095, %v1142
    %v1144 = vsub.f32 1.0, %v1143
    %v1145 = vmul.f32 %v1142, %v1144
    %v1146 = vadd.f32 %v1142, %v1145
    %vm1147 = vweird.f32 %v1095
    %vm1148 = vweird.f32 %v1142
    %vm1149 = vmor %vm1147, %vm1148
    %v1150 = vsel %vm1149, %v1142, %v1146
    %v1151 = vand.u32 2147483647, %v1095
    %vm1152 = vcmp.eq.f32.partialorder %v1151, 8.507059e+37
    %v1153 = vand.u32 %v1095, 2147483648
    %v1154 = vor.u32 1.1754944e-38, %v1153
    %v1155 = vsel %vm1152, %v1154, %v1150
    %v1156 = vmul.f32 %v1034, %v1155
    %v1157 = vrcp.pop %v1096
    %v1158 = vmul.f32 %v1096, %v1157
    %v1159 = vsub.f32 1.0, %v1158
    %v1160 = vmul.f32 %v1157, %v1159
    %v1161 = vadd.f32 %v1157, %v1160
    %vm1162 = vweird.f32 %v1096
    %vm1163 = vweird.f32 %v1157
    %vm1164 = vmor %vm1162, %vm1163
    %v1165 = vsel %vm1164, %v1157, %v1161
    %v1166 = vand.u32 2147483647, %v1096
    %vm1167 = vcmp.eq.f32.partialorder %v1166, 8.507059e+37
    %v1168 = vand.u32 %v1096, 2147483648
    %v1169 = vor.u32 1.1754944e-38, %v1168
    %v1170 = vsel %vm1167, %v1169, %v1165
    %v1171 = vmul.f32 %v1036, %v1170
    %v1172 = vld [vmem:[%s5 + $0x1] sm:$0x1]
    %v1173 = vperm.slane %v1172, 0
    %v1174 = vadd.f32 %v1111, %v1173
    %v1175 = vadd.f32 %v1126, %v1173
    %v1176 = vadd.f32 %v1141, %v1173
    %v1177 = vadd.f32 %v1156, %v1173
    %v1178 = vadd.f32 %v1171, %v1173
    %v1179 = vld [vmem:[#allocation8] sm:$0xff]
    %v1180 = vld [vmem:[#allocation8 + $0x8] sm:$0xff]
    %v1181 = vld [vmem:[#allocation8 + $0x10] sm:$0xff]
    %v1182 = vld [vmem:[#allocation8 + $0x18] sm:$0xff]
    %v1183 = vld [vmem:[#allocation8 + $0x20] sm:$0xff]
    %v1184 = vld [vmem:[#allocation8 + $0x28] sm:$0xff]
    %v1185 = vld [vmem:[#allocation8 + $0x30] sm:$0xff]
    %v1186 = vld [vmem:[#allocation8 + $0x38] sm:$0xff]
    %v1187 = vld [vmem:[#allocation8 + $0x40] sm:$0xff]
    %v1188 = vld [vmem:[#allocation8 + $0x48] sm:$0xff]
    %v1189 = vld [vmem:[#allocation8 + $0x50] sm:$0xff]
    %v1190 = vld [vmem:[#allocation8 + $0x58] sm:$0xff]
    %v1191 = vld [vmem:[#allocation8 + $0x60] sm:$0xff]
    %v1192 = vld [vmem:[#allocation8 + $0x68] sm:$0xff]
    %v1193 = vld [vmem:[#allocation8 + $0x70] sm:$0xff]
    %v1194 = vld [vmem:[#allocation8 + $0x78] sm:$0xff]
    %v1195 = vld [vmem:[#allocation8 + $0x80] sm:$0xff]
    %v1196 = vld [vmem:[#allocation8 + $0x88] sm:$0xff]
    %v1197 = vld [vmem:[#allocation8 + $0x90] sm:$0xff]
    %v1198 = vld [vmem:[#allocation8 + $0x98] sm:$0xff]
    %v1199 = vld [vmem:[#allocation8 + $0xa0] sm:$0xff]
    %v1200 = vld [vmem:[#allocation8 + $0xa8] sm:$0xff]
    %v1201 = vld [vmem:[#allocation8 + $0xb0] sm:$0xff]
    %v1202 = vld [vmem:[#allocation8 + $0xb8] sm:$0xff]
    %v1203 = vld [vmem:[#allocation8 + $0xc0] sm:$0xff]
    %v1204 = vld [vmem:[#allocation8 + $0xc8] sm:$0xff]
    %v1205 = vld [vmem:[#allocation8 + $0xd0] sm:$0xff]
    %v1206 = vld [vmem:[#allocation8 + $0xd8] sm:$0xff]
    %v1207 = vld [vmem:[#allocation8 + $0xe0] sm:$0xff]
    %v1208 = vld [vmem:[#allocation8 + $0xe8] sm:$0xff]
    %v1209 = vld [vmem:[#allocation8 + $0xf0] sm:$0xff]
    %v1210 = vld [vmem:[#allocation8 + $0xf8] sm:$0xff]
    %v1211 = vld [vmem:[#allocation8 + $0x100] sm:$0xff]
    %v1212 = vld [vmem:[#allocation8 + $0x108] sm:$0xff]
    %v1213 = vld [vmem:[#allocation8 + $0x110] sm:$0xff]
    %v1214 = vld [vmem:[#allocation8 + $0x118] sm:$0xff]
    %v1215 = vld [vmem:[#allocation8 + $0x120] sm:$0xff]
    %v1216 = vld [vmem:[#allocation8 + $0x128] sm:$0xff]
    %v1217 = vld [vmem:[#allocation8 + $0x130] sm:$0xff]
    %v1218 = vld [vmem:[#allocation8 + $0x138] sm:$0xff]
    %v1219 = vld [vmem:[#allocation8 + $0x140] sm:$0xff]
    %v1220 = vld [vmem:[#allocation8 + $0x148] sm:$0xff]
    %v1221 = vld [vmem:[#allocation8 + $0x150] sm:$0xff]
    %v1222 = vld [vmem:[#allocation8 + $0x158] sm:$0xff]
    %v1223 = vld [vmem:[#allocation8 + $0x160] sm:$0xff]
    %v1224 = vld [vmem:[#allocation8 + $0x168] sm:$0xff]
    %v1225 = vld [vmem:[#allocation8 + $0x170] sm:$0xff]
    %v1226 = vld [vmem:[#allocation8 + $0x178] sm:$0xff]
    %v1227 = vld [vmem:[#allocation8 + $0x180] sm:$0xff]
    %v1228 = vld [vmem:[#allocation8 + $0x188] sm:$0xff]
    %v1229 = vld [vmem:[#allocation8 + $0x190] sm:$0xff]
    %v1230 = vld [vmem:[#allocation8 + $0x198] sm:$0xff]
    %v1231 = vld [vmem:[#allocation8 + $0x1a0] sm:$0xff]
    %v1232 = vld [vmem:[#allocation8 + $0x1a8] sm:$0xff]
    %v1233 = vld [vmem:[#allocation8 + $0x1b0] sm:$0xff]
    %v1234 = vld [vmem:[#allocation8 + $0x1b8] sm:$0xff]
    %v1235 = vld [vmem:[#allocation8 + $0x1c0] sm:$0xff]
    %v1236 = vld [vmem:[#allocation8 + $0x1c8] sm:$0xff]
    %v1237 = vld [vmem:[#allocation8 + $0x1d0] sm:$0xff]
    %v1238 = vld [vmem:[#allocation8 + $0x1d8] sm:$0xff]
    %v1239 = vld [vmem:[#allocation8 + $0x1e0] sm:$0xff]
    %v1240 = vld [vmem:[#allocation8 + $0x1e8] sm:$0xff]
    %v1241 = vld [vmem:[#allocation8 + $0x1f0] sm:$0xff]
    %v1242 = vld [vmem:[#allocation8 + $0x1f8] sm:$0xff]
    %v1243 = vld [vmem:[#allocation8 + $0x200] sm:$0xff]
    %v1244 = vld [vmem:[#allocation8 + $0x208] sm:$0xff]
    %v1245 = vld [vmem:[#allocation8 + $0x210] sm:$0xff]
    %v1246 = vld [vmem:[#allocation8 + $0x218] sm:$0xff]
    %v1247 = vld [vmem:[#allocation8 + $0x220] sm:$0xff]
    %v1248 = vld [vmem:[#allocation8 + $0x228] sm:$0xff]
    %v1249 = vld [vmem:[#allocation8 + $0x230] sm:$0xff]
    %v1250 = vld [vmem:[#allocation8 + $0x238] sm:$0xff]
    %v1251 = vld [vmem:[#allocation8 + $0x240] sm:$0xff]
    %v1252 = vld [vmem:[#allocation8 + $0x248] sm:$0xff]
    %v1253 = vld [vmem:[#allocation8 + $0x250] sm:$0xff]
    %v1254 = vld [vmem:[#allocation8 + $0x258] sm:$0xff]
    %v1255 = vld [vmem:[#allocation8 + $0x260] sm:$0xff]
    %v1256 = vld [vmem:[#allocation8 + $0x268] sm:$0xff]
    %v1257 = vld [vmem:[#allocation8 + $0x270] sm:$0xff]
    %v1258 = vld [vmem:[#allocation8 + $0x278] sm:$0xff]
    %v1259 = vld [vmem:[#allocation8 + $0x280] sm:$0xff]
    %v1260 = vld [vmem:[#allocation8 + $0x288] sm:$0xff]
    %v1261 = vld [vmem:[#allocation8 + $0x290] sm:$0xff]
    %v1262 = vld [vmem:[#allocation8 + $0x298] sm:$0xff]
    %v1263 = vld [vmem:[#allocation8 + $0x2a0] sm:$0xff]
    %v1264 = vld [vmem:[#allocation8 + $0x2a8] sm:$0xff]
    %v1265 = vld [vmem:[#allocation8 + $0x2b0] sm:$0xff]
    %v1266 = vld [vmem:[#allocation8 + $0x2b8] sm:$0xff]
    %v1267 = vld [vmem:[#allocation8 + $0x2c0] sm:$0xff]
    %v1268 = vld [vmem:[#allocation8 + $0x2c8] sm:$0xff]
    %v1269 = vld [vmem:[#allocation8 + $0x2d0] sm:$0xff]
    %v1270 = vld [vmem:[#allocation8 + $0x2d8] sm:$0xff]
    %v1271 = vld [vmem:[#allocation8 + $0x2e0] sm:$0xff]
    %v1272 = vld [vmem:[#allocation8 + $0x2e8] sm:$0xff]
    %v1273 = vld [vmem:[#allocation8 + $0x2f0] sm:$0xff]
    %v1274 = vld [vmem:[#allocation8 + $0x2f8] sm:$0xff]
    %v1275 = vld [vmem:[#allocation8 + $0x300] sm:$0xff]
    %v1276 = vld [vmem:[#allocation8 + $0x308] sm:$0xff]
    %v1277 = vld [vmem:[#allocation8 + $0x310] sm:$0xff]
    %v1278 = vld [vmem:[#allocation8 + $0x318] sm:$0xff]
    %v1279 = vld [vmem:[#allocation8 + $0x320] sm:$0xff]
    %v1280 = vld [vmem:[#allocation8 + $0x328] sm:$0xff]
    %v1281 = vld [vmem:[#allocation8 + $0x330] sm:$0xff]
    %v1282 = vld [vmem:[#allocation8 + $0x338] sm:$0xff]
    %v1283 = vld [vmem:[#allocation8 + $0x340] sm:$0xff]
    %v1284 = vld [vmem:[#allocation8 + $0x348] sm:$0xff]
    %v1285 = vld [vmem:[#allocation8 + $0x350] sm:$0xff]
    %v1286 = vld [vmem:[#allocation8 + $0x358] sm:$0xff]
    %v1287 = vld [vmem:[#allocation8 + $0x360] sm:$0xff]
    %v1288 = vld [vmem:[#allocation8 + $0x368] sm:$0xff]
    %v1289 = vld [vmem:[#allocation8 + $0x370] sm:$0xff]
    %v1290 = vld [vmem:[#allocation8 + $0x378] sm:$0xff]
    %v1291 = vld [vmem:[#allocation8 + $0x380] sm:$0xff]
    %v1292 = vld [vmem:[#allocation8 + $0x388] sm:$0xff]
    %v1293 = vld [vmem:[#allocation8 + $0x390] sm:$0xff]
    %v1294 = vld [vmem:[#allocation8 + $0x398] sm:$0xff]
    %v1295 = vld [vmem:[#allocation8 + $0x3a0] sm:$0xff]
    %v1296 = vld [vmem:[#allocation8 + $0x3a8] sm:$0xff]
    %v1297 = vld [vmem:[#allocation8 + $0x3b0] sm:$0xff]
    %v1298 = vld [vmem:[#allocation8 + $0x3b8] sm:$0xff]
    %v1299 = vld [vmem:[#allocation8 + $0x3c0] sm:$0xff]
    %v1300 = vld [vmem:[#allocation8 + $0x3c8] sm:$0xff]
    %v1301 = vld [vmem:[#allocation8 + $0x3d0] sm:$0xff]
    %v1302 = vld [vmem:[#allocation8 + $0x3d8] sm:$0xff]
    %v1303 = vld [vmem:[#allocation8 + $0x3e0] sm:$0xff]
    %v1304 = vld [vmem:[#allocation8 + $0x3e8] sm:$0xff]
    %v1305 = vld [vmem:[#allocation8 + $0x3f0] sm:$0xff]
    %v1306 = vld [vmem:[#allocation8 + $0x3f8] sm:$0xff]
    %1307 = vmatpush.msra.mxu0 %v1299
    %1308 = vmatpush.msra.mxu0 %v1291
    %1309 = vmatpush.msra.mxu0 %v1283
    %1310 = vmatpush.msra.mxu0 %v1275
    %1311 = vmatpush.msra.mxu0 %v1267
    %1312 = vmatpush.msra.mxu0 %v1259
    %1313 = vmatpush.msra.mxu0 %v1251
    %1314 = vmatpush.msra.mxu0 %v1243
    %1315 = vmatpush.msra.mxu0 %v1235
    %1316 = vmatpush.msra.mxu0 %v1227
    %1317 = vmatpush.msra.mxu0 %v1219
    %1318 = vmatpush.msra.mxu0 %v1211
    %1319 = vmatpush.msra.mxu0 %v1203
    %1320 = vmatpush.msra.mxu0 %v1195
    %1321 = vmatpush.msra.mxu0 %v1187
    %1322 = vmatpush.msra.mxu0 %v1179
    %1323 = vmatmul.f32.gmra.mxu0 %v1174
    %v1324 = vpop.f32.mrf.mxu0
    %v1325 = vadd.f32 0.0, %v1324
    %1326 = vmatmul.f32.gmra.mxu0 %v1175
    %v1327 = vpop.f32.mrf.mxu0
    %v1328 = vadd.f32 0.0, %v1327
    %1329 = vmatmul.f32.gmra.mxu0 %v1176
    %v1330 = vpop.f32.mrf.mxu0
    %v1331 = vadd.f32 0.0, %v1330
    %1332 = vmatmul.f32.gmra.mxu0 %v1177
    %v1333 = vpop.f32.mrf.mxu0
    %v1334 = vadd.f32 0.0, %v1333
    %1335 = vmatmul.f32.gmra.mxu0 %v1178
    %v1336 = vpop.f32.mrf.mxu0
    %v1337 = vadd.f32 0.0, %v1336
    %1338 = vdwg.mxu0
    %1339 = vmatpush.msra.mxu0 %v1300
    %1340 = vmatpush.msra.mxu0 %v1292
    %1341 = vmatpush.msra.mxu0 %v1284
    %1342 = vmatpush.msra.mxu0 %v1276
    %1343 = vmatpush.msra.mxu0 %v1268
    %1344 = vmatpush.msra.mxu0 %v1260
    %1345 = vmatpush.msra.mxu0 %v1252
    %1346 = vmatpush.msra.mxu0 %v1244
    %1347 = vmatpush.msra.mxu0 %v1236
    %1348 = vmatpush.msra.mxu0 %v1228
    %1349 = vmatpush.msra.mxu0 %v1220
    %1350 = vmatpush.msra.mxu0 %v1212
    %1351 = vmatpush.msra.mxu0 %v1204
    %1352 = vmatpush.msra.mxu0 %v1196
    %1353 = vmatpush.msra.mxu0 %v1188
    %1354 = vmatpush.msra.mxu0 %v1180
    %1355 = vmatmul.f32.gmra.mxu0 %v1174
    %v1356 = vpop.f32.mrf.mxu0
    %v1357 = vadd.f32 0.0, %v1356
    %1358 = vmatmul.f32.gmra.mxu0 %v1175
    %v1359 = vpop.f32.mrf.mxu0
    %v1360 = vadd.f32 0.0, %v1359
    %1361 = vmatmul.f32.gmra.mxu0 %v1176
    %v1362 = vpop.f32.mrf.mxu0
    %v1363 = vadd.f32 0.0, %v1362
    %1364 = vmatmul.f32.gmra.mxu0 %v1177
    %v1365 = vpop.f32.mrf.mxu0
    %v1366 = vadd.f32 0.0, %v1365
    %1367 = vmatmul.f32.gmra.mxu0 %v1178
    %v1368 = vpop.f32.mrf.mxu0
    %v1369 = vadd.f32 0.0, %v1368
    %1370 = vdwg.mxu0
    %1371 = vmatpush.msra.mxu0 %v1301
    %1372 = vmatpush.msra.mxu0 %v1293
    %1373 = vmatpush.msra.mxu0 %v1285
    %1374 = vmatpush.msra.mxu0 %v1277
    %1375 = vmatpush.msra.mxu0 %v1269
    %1376 = vmatpush.msra.mxu0 %v1261
    %1377 = vmatpush.msra.mxu0 %v1253
    %1378 = vmatpush.msra.mxu0 %v1245
    %1379 = vmatpush.msra.mxu0 %v1237
    %1380 = vmatpush.msra.mxu0 %v1229
    %1381 = vmatpush.msra.mxu0 %v1221
    %1382 = vmatpush.msra.mxu0 %v1213
    %1383 = vmatpush.msra.mxu0 %v1205
    %1384 = vmatpush.msra.mxu0 %v1197
    %1385 = vmatpush.msra.mxu0 %v1189
    %1386 = vmatpush.msra.mxu0 %v1181
    %1387 = vmatmul.f32.gmra.mxu0 %v1174
    %v1388 = vpop.f32.mrf.mxu0
    %v1389 = vadd.f32 0.0, %v1388
    %1390 = vmatmul.f32.gmra.mxu0 %v1175
    %v1391 = vpop.f32.mrf.mxu0
    %v1392 = vadd.f32 0.0, %v1391
    %1393 = vmatmul.f32.gmra.mxu0 %v1176
    %v1394 = vpop.f32.mrf.mxu0
    %v1395 = vadd.f32 0.0, %v1394
    %1396 = vmatmul.f32.gmra.mxu0 %v1177
    %v1397 = vpop.f32.mrf.mxu0
    %v1398 = vadd.f32 0.0, %v1397
    %1399 = vmatmul.f32.gmra.mxu0 %v1178
    %v1400 = vpop.f32.mrf.mxu0
    %v1401 = vadd.f32 0.0, %v1400
    %1402 = vdwg.mxu0
    %1403 = vmatpush.msra.mxu0 %v1302
    %1404 = vmatpush.msra.mxu0 %v1294
    %1405 = vmatpush.msra.mxu0 %v1286
    %1406 = vmatpush.msra.mxu0 %v1278
    %1407 = vmatpush.msra.mxu0 %v1270
    %1408 = vmatpush.msra.mxu0 %v1262
    %1409 = vmatpush.msra.mxu0 %v1254
    %1410 = vmatpush.msra.mxu0 %v1246
    %1411 = vmatpush.msra.mxu0 %v1238
    %1412 = vmatpush.msra.mxu0 %v1230
    %1413 = vmatpush.msra.mxu0 %v1222
    %1414 = vmatpush.msra.mxu0 %v1214
    %1415 = vmatpush.msra.mxu0 %v1206
    %1416 = vmatpush.msra.mxu0 %v1198
    %1417 = vmatpush.msra.mxu0 %v1190
    %1418 = vmatpush.msra.mxu0 %v1182
    %1419 = vmatmul.f32.gmra.mxu0 %v1174
    %v1420 = vpop.f32.mrf.mxu0
    %v1421 = vadd.f32 0.0, %v1420
    %1422 = vmatmul.f32.gmra.mxu0 %v1175
    %v1423 = vpop.f32.mrf.mxu0
    %v1424 = vadd.f32 0.0, %v1423
    %1425 = vmatmul.f32.gmra.mxu0 %v1176
    %v1426 = vpop.f32.mrf.mxu0
    %v1427 = vadd.f32 0.0, %v1426
    %1428 = vmatmul.f32.gmra.mxu0 %v1177
    %v1429 = vpop.f32.mrf.mxu0
    %v1430 = vadd.f32 0.0, %v1429
    %1431 = vmatmul.f32.gmra.mxu0 %v1178
    %v1432 = vpop.f32.mrf.mxu0
    %v1433 = vadd.f32 0.0, %v1432
    %1434 = vdwg.mxu0
    %1435 = vmatpush.msra.mxu0 %v1303
    %1436 = vmatpush.msra.mxu0 %v1295
    %1437 = vmatpush.msra.mxu0 %v1287
    %1438 = vmatpush.msra.mxu0 %v1279
    %1439 = vmatpush.msra.mxu0 %v1271
    %1440 = vmatpush.msra.mxu0 %v1263
    %1441 = vmatpush.msra.mxu0 %v1255
    %1442 = vmatpush.msra.mxu0 %v1247
    %1443 = vmatpush.msra.mxu0 %v1239
    %1444 = vmatpush.msra.mxu0 %v1231
    %1445 = vmatpush.msra.mxu0 %v1223
    %1446 = vmatpush.msra.mxu0 %v1215
    %1447 = vmatpush.msra.mxu0 %v1207
    %1448 = vmatpush.msra.mxu0 %v1199
    %1449 = vmatpush.msra.mxu0 %v1191
    %1450 = vmatpush.msra.mxu0 %v1183
    %1451 = vmatmul.f32.gmra.mxu0 %v1174
    %v1452 = vpop.f32.mrf.mxu0
    %v1453 = vadd.f32 0.0, %v1452
    %1454 = vmatmul.f32.gmra.mxu0 %v1175
    %v1455 = vpop.f32.mrf.mxu0
    %v1456 = vadd.f32 0.0, %v1455
    %1457 = vmatmul.f32.gmra.mxu0 %v1176
    %v1458 = vpop.f32.mrf.mxu0
    %v1459 = vadd.f32 0.0, %v1458
    %1460 = vmatmul.f32.gmra.mxu0 %v1177
    %v1461 = vpop.f32.mrf.mxu0
    %v1462 = vadd.f32 0.0, %v1461
    %1463 = vmatmul.f32.gmra.mxu0 %v1178
    %v1464 = vpop.f32.mrf.mxu0
    %v1465 = vadd.f32 0.0, %v1464
    %1466 = vdwg.mxu0
    %1467 = vmatpush.msra.mxu0 %v1304
    %1468 = vmatpush.msra.mxu0 %v1296
    %1469 = vmatpush.msra.mxu0 %v1288
    %1470 = vmatpush.msra.mxu0 %v1280
    %1471 = vmatpush.msra.mxu0 %v1272
    %1472 = vmatpush.msra.mxu0 %v1264
    %1473 = vmatpush.msra.mxu0 %v1256
    %1474 = vmatpush.msra.mxu0 %v1248
    %1475 = vmatpush.msra.mxu0 %v1240
    %1476 = vmatpush.msra.mxu0 %v1232
    %1477 = vmatpush.msra.mxu0 %v1224
    %1478 = vmatpush.msra.mxu0 %v1216
    %1479 = vmatpush.msra.mxu0 %v1208
    %1480 = vmatpush.msra.mxu0 %v1200
    %1481 = vmatpush.msra.mxu0 %v1192
    %1482 = vmatpush.msra.mxu0 %v1184
    %1483 = vmatmul.f32.gmra.mxu0 %v1174
    %v1484 = vpop.f32.mrf.mxu0
    %v1485 = vadd.f32 0.0, %v1484
    %1486 = vmatmul.f32.gmra.mxu0 %v1175
    %v1487 = vpop.f32.mrf.mxu0
    %v1488 = vadd.f32 0.0, %v1487
    %1489 = vmatmul.f32.gmra.mxu0 %v1176
    %v1490 = vpop.f32.mrf.mxu0
    %v1491 = vadd.f32 0.0, %v1490
    %1492 = vmatmul.f32.gmra.mxu0 %v1177
    %v1493 = vpop.f32.mrf.mxu0
    %v1494 = vadd.f32 0.0, %v1493
    %1495 = vmatmul.f32.gmra.mxu0 %v1178
    %v1496 = vpop.f32.mrf.mxu0
    %v1497 = vadd.f32 0.0, %v1496
    %1498 = vdwg.mxu0
    %1499 = vmatpush.msra.mxu0 %v1305
    %1500 = vmatpush.msra.mxu0 %v1297
    %1501 = vmatpush.msra.mxu0 %v1289
    %1502 = vmatpush.msra.mxu0 %v1281
    %1503 = vmatpush.msra.mxu0 %v1273
    %1504 = vmatpush.msra.mxu0 %v1265
    %1505 = vmatpush.msra.mxu0 %v1257
    %1506 = vmatpush.msra.mxu0 %v1249
    %1507 = vmatpush.msra.mxu0 %v1241
    %1508 = vmatpush.msra.mxu0 %v1233
    %1509 = vmatpush.msra.mxu0 %v1225
    %1510 = vmatpush.msra.mxu0 %v1217
    %1511 = vmatpush.msra.mxu0 %v1209
    %1512 = vmatpush.msra.mxu0 %v1201
    %1513 = vmatpush.msra.mxu0 %v1193
    %1514 = vmatpush.msra.mxu0 %v1185
    %1515 = vmatmul.f32.gmra.mxu0 %v1174
    %v1516 = vpop.f32.mrf.mxu0
    %v1517 = vadd.f32 0.0, %v1516
    %1518 = vmatmul.f32.gmra.mxu0 %v1175
    %v1519 = vpop.f32.mrf.mxu0
    %v1520 = vadd.f32 0.0, %v1519
    %1521 = vmatmul.f32.gmra.mxu0 %v1176
    %v1522 = vpop.f32.mrf.mxu0
    %v1523 = vadd.f32 0.0, %v1522
    %1524 = vmatmul.f32.gmra.mxu0 %v1177
    %v1525 = vpop.f32.mrf.mxu0
    %v1526 = vadd.f32 0.0, %v1525
    %1527 = vmatmul.f32.gmra.mxu0 %v1178
    %v1528 = vpop.f32.mrf.mxu0
    %v1529 = vadd.f32 0.0, %v1528
    %1530 = vdwg.mxu0
    %1531 = vmatpush.msra.mxu0 %v1306
    %1532 = vmatpush.msra.mxu0 %v1298
    %1533 = vmatpush.msra.mxu0 %v1290
    %1534 = vmatpush.msra.mxu0 %v1282
    %1535 = vmatpush.msra.mxu0 %v1274
    %1536 = vmatpush.msra.mxu0 %v1266
    %1537 = vmatpush.msra.mxu0 %v1258
    %1538 = vmatpush.msra.mxu0 %v1250
    %1539 = vmatpush.msra.mxu0 %v1242
    %1540 = vmatpush.msra.mxu0 %v1234
    %1541 = vmatpush.msra.mxu0 %v1226
    %1542 = vmatpush.msra.mxu0 %v1218
    %1543 = vmatpush.msra.mxu0 %v1210
    %1544 = vmatpush.msra.mxu0 %v1202
    %1545 = vmatpush.msra.mxu0 %v1194
    %1546 = vmatpush.msra.mxu0 %v1186
    %1547 = vmatmul.f32.gmra.mxu0 %v1174
    %v1548 = vpop.f32.mrf.mxu0
    %v1549 = vadd.f32 0.0, %v1548
    %1550 = vmatmul.f32.gmra.mxu0 %v1175
    %v1551 = vpop.f32.mrf.mxu0
    %v1552 = vadd.f32 0.0, %v1551
    %1553 = vmatmul.f32.gmra.mxu0 %v1176
    %v1554 = vpop.f32.mrf.mxu0
    %v1555 = vadd.f32 0.0, %v1554
    %1556 = vmatmul.f32.gmra.mxu0 %v1177
    %v1557 = vpop.f32.mrf.mxu0
    %v1558 = vadd.f32 0.0, %v1557
    %1559 = vmatmul.f32.gmra.mxu0 %v1178
    %v1560 = vpop.f32.mrf.mxu0
    %v1561 = vadd.f32 0.0, %v1560
    %1562 = vdwg.mxu0
    %v1563 = vmul.f32 %v253, %v1325
    %v1564 = vmul.f32 %v285, %v1357
    %v1565 = vmul.f32 %v317, %v1389
    %v1566 = vmul.f32 %v349, %v1421
    %v1567 = vmul.f32 %v381, %v1453
    %v1568 = vmul.f32 %v413, %v1485
    %v1569 = vmul.f32 %v445, %v1517
    %v1570 = vmul.f32 %v477, %v1549
    %v1571 = vmul.f32 %v256, %v1328
    %v1572 = vmul.f32 %v288, %v1360
    %v1573 = vmul.f32 %v320, %v1392
    %v1574 = vmul.f32 %v352, %v1424
    %v1575 = vmul.f32 %v384, %v1456
    %v1576 = vmul.f32 %v416, %v1488
    %v1577 = vmul.f32 %v448, %v1520
    %v1578 = vmul.f32 %v480, %v1552
    %v1579 = vmul.f32 %v259, %v1331
    %v1580 = vmul.f32 %v291, %v1363
    %v1581 = vmul.f32 %v323, %v1395
    %v1582 = vmul.f32 %v355, %v1427
    %v1583 = vmul.f32 %v387, %v1459
    %v1584 = vmul.f32 %v419, %v1491
    %v1585 = vmul.f32 %v451, %v1523
    %v1586 = vmul.f32 %v483, %v1555
    %v1587 = vmul.f32 %v262, %v1334
    %v1588 = vmul.f32 %v294, %v1366
    %v1589 = vmul.f32 %v326, %v1398
    %v1590 = vmul.f32 %v358, %v1430
    %v1591 = vmul.f32 %v390, %v1462
    %v1592 = vmul.f32 %v422, %v1494
    %v1593 = vmul.f32 %v454, %v1526
    %v1594 = vmul.f32 %v486, %v1558
    %v1595 = vmul.f32 %v265, %v1337
    %v1596 = vmul.f32 %v297, %v1369
    %v1597 = vmul.f32 %v329, %v1401
    %v1598 = vmul.f32 %v361, %v1433
    %v1599 = vmul.f32 %v393, %v1465
    %v1600 = vmul.f32 %v425, %v1497
    %v1601 = vmul.f32 %v457, %v1529
    %v1602 = vmul.f32 %v489, %v1561
    %v1603 = vadd.f32 %v1563, %v1564
    %v1604 = vadd.f32 %v1571, %v1572
    %v1605 = vadd.f32 %v1579, %v1580
    %v1606 = vadd.f32 %v1587, %v1588
    %v1607 = vadd.f32 %v1595, %v1596
    %v1608 = vadd.f32 %v1603, %v1565
    %v1609 = vadd.f32 %v1604, %v1573
    %v1610 = vadd.f32 %v1605, %v1581
    %v1611 = vadd.f32 %v1606, %v1589
    %v1612 = vadd.f32 %v1607, %v1597
    %v1613 = vadd.f32 %v1608, %v1566
    %v1614 = vadd.f32 %v1609, %v1574
    %v1615 = vadd.f32 %v1610, %v1582
    %v1616 = vadd.f32 %v1611, %v1590
    %v1617 = vadd.f32 %v1612, %v1598
    %v1618 = vadd.f32 %v1613, %v1567
    %v1619 = vadd.f32 %v1614, %v1575
    %v1620 = vadd.f32 %v1615, %v1583
    %v1621 = vadd.f32 %v1616, %v1591
    %v1622 = vadd.f32 %v1617, %v1599
    %v1623 = vadd.f32 %v1618, %v1568
    %v1624 = vadd.f32 %v1619, %v1576
    %v1625 = vadd.f32 %v1620, %v1584
    %v1626 = vadd.f32 %v1621, %v1592
    %v1627 = vadd.f32 %v1622, %v1600
    %v1628 = vadd.f32 %v1623, %v1569
    %v1629 = vadd.f32 %v1624, %v1577
    %v1630 = vadd.f32 %v1625, %v1585
    %v1631 = vadd.f32 %v1626, %v1593
    %v1632 = vadd.f32 %v1627, %v1601
    %v1633 = vadd.f32 %v1628, %v1570
    %v1634 = vadd.f32 %v1629, %v1578
    %v1635 = vadd.f32 %v1630, %v1586
    %v1636 = vadd.f32 %v1631, %v1594
    %v1637 = vadd.f32 %v1632, %v1602
    %v1638 = vmul.f32 %v1633, %v1633
    %v1639 = vmul.f32 %v1634, %v1634
    %v1640 = vmul.f32 %v1635, %v1635
    %v1641 = vmul.f32 %v1636, %v1636
    %v1642 = vmul.f32 %v1637, %v1637
    %v1643 = vld [vmem:[#allocation10] sm:$0xff]
    %v1644 = vld [vmem:[#allocation10 + $0x8] sm:$0xff]
    %v1645 = vld [vmem:[#allocation10 + $0x10] sm:$0xff]
    %v1646 = vld [vmem:[#allocation10 + $0x18] sm:$0xff]
    %v1647 = vld [vmem:[#allocation10 + $0x20] sm:$0xff]
    %v1648 = vld [vmem:[#allocation10 + $0x28] sm:$0xff]
    %v1649 = vld [vmem:[#allocation10 + $0x30] sm:$0xff]
    %v1650 = vld [vmem:[#allocation10 + $0x38] sm:$0xff]
    %v1651 = vld [vmem:[#allocation10 + $0x40] sm:$0xff]
    %v1652 = vld [vmem:[#allocation10 + $0x48] sm:$0xff]
    %v1653 = vld [vmem:[#allocation10 + $0x50] sm:$0xff]
    %v1654 = vld [vmem:[#allocation10 + $0x58] sm:$0xff]
    %v1655 = vld [vmem:[#allocation10 + $0x60] sm:$0xff]
    %v1656 = vld [vmem:[#allocation10 + $0x68] sm:$0xff]
    %v1657 = vld [vmem:[#allocation10 + $0x70] sm:$0xff]
    %v1658 = vld [vmem:[#allocation10 + $0x78] sm:$0xff]
    %1659 = vmatpush.msra.mxu0 %v1658
    %1660 = vmatpush.msra.mxu0 %v1657
    %1661 = vmatpush.msra.mxu0 %v1656
    %1662 = vmatpush.msra.mxu0 %v1655
    %1663 = vmatpush.msra.mxu0 %v1654
    %1664 = vmatpush.msra.mxu0 %v1653
    %1665 = vmatpush.msra.mxu0 %v1652
    %1666 = vmatpush.msra.mxu0 %v1651
    %1667 = vmatpush.msra.mxu0 %v1650
    %1668 = vmatpush.msra.mxu0 %v1649
    %1669 = vmatpush.msra.mxu0 %v1648
    %1670 = vmatpush.msra.mxu0 %v1647
    %1671 = vmatpush.msra.mxu0 %v1646
    %1672 = vmatpush.msra.mxu0 %v1645
    %1673 = vmatpush.msra.mxu0 %v1644
    %1674 = vmatpush.msra.mxu0 %v1643
    %1675 = vmatmul.f32.gmra.mxu0 %v1638
    %v1676 = vpop.f32.mrf.mxu0
    %v1677 = vadd.f32 0.0, %v1676
    %1678 = vmatmul.f32.gmra.mxu0 %v1639
    %v1679 = vpop.f32.mrf.mxu0
    %v1680 = vadd.f32 0.0, %v1679
    %1681 = vmatmul.f32.gmra.mxu0 %v1640
    %v1682 = vpop.f32.mrf.mxu0
    %v1683 = vadd.f32 0.0, %v1682
    %1684 = vmatmul.f32.gmra.mxu0 %v1641
    %v1685 = vpop.f32.mrf.mxu0
    %v1686 = vadd.f32 0.0, %v1685
    %1687 = vmatmul.f32.gmra.mxu0 %v1642
    %v1688 = vpop.f32.mrf.mxu0
    %v1689 = vadd.f32 0.0, %v1688
    %1690 = vdwg.mxu0
    %v1691 = vrsqrt.pop %v1677
    %v1692 = vmul.f32 %v1691, %v1677
    %v1693 = vmul.f32 %v1692, %v1691
    %v1694 = vmul.f32 0.5, %v1693
    %v1695 = vsub.f32 1.5, %v1694
    %v1696 = vmul.f32 %v1691, %v1695
    %v1697 = vmul.f32 %v1677, %v1696
    %vm1698 = vcmp.eq.f32.partialorder %v1677, inf
    %v1699 = vsel %vm1698, %v1677, %v1697
    %vm1700 = vcmp.eq.f32.partialorder %v1677, 0.0
    %v1701 = vand.u32 %v1677, 2147483648
    %v1702 = vsel %vm1700, %v1701, %v1699
    %v1703 = vrsqrt.pop %v1680
    %v1704 = vmul.f32 %v1703, %v1680
    %v1705 = vmul.f32 %v1704, %v1703
    %v1706 = vmul.f32 0.5, %v1705
    %v1707 = vsub.f32 1.5, %v1706
    %v1708 = vmul.f32 %v1703, %v1707
    %v1709 = vmul.f32 %v1680, %v1708
    %vm1710 = vcmp.eq.f32.partialorder %v1680, inf
    %v1711 = vsel %vm1710, %v1680, %v1709
    %vm1712 = vcmp.eq.f32.partialorder %v1680, 0.0
    %v1713 = vand.u32 %v1680, 2147483648
    %v1714 = vsel %vm1712, %v1713, %v1711
    %v1715 = vrsqrt.pop %v1683
    %v1716 = vmul.f32 %v1715, %v1683
    %v1717 = vmul.f32 %v1716, %v1715
    %v1718 = vmul.f32 0.5, %v1717
    %v1719 = vsub.f32 1.5, %v1718
    %v1720 = vmul.f32 %v1715, %v1719
    %v1721 = vmul.f32 %v1683, %v1720
    %vm1722 = vcmp.eq.f32.partialorder %v1683, inf
    %v1723 = vsel %vm1722, %v1683, %v1721
    %vm1724 = vcmp.eq.f32.partialorder %v1683, 0.0
    %v1725 = vand.u32 %v1683, 2147483648
    %v1726 = vsel %vm1724, %v1725, %v1723
    %v1727 = vrsqrt.pop %v1686
    %v1728 = vmul.f32 %v1727, %v1686
    %v1729 = vmul.f32 %v1728, %v1727
    %v1730 = vmul.f32 0.5, %v1729
    %v1731 = vsub.f32 1.5, %v1730
    %v1732 = vmul.f32 %v1727, %v1731
    %v1733 = vmul.f32 %v1686, %v1732
    %vm1734 = vcmp.eq.f32.partialorder %v1686, inf
    %v1735 = vsel %vm1734, %v1686, %v1733
    %vm1736 = vcmp.eq.f32.partialorder %v1686, 0.0
    %v1737 = vand.u32 %v1686, 2147483648
    %v1738 = vsel %vm1736, %v1737, %v1735
    %v1739 = vrsqrt.pop %v1689
    %v1740 = vmul.f32 %v1739, %v1689
    %v1741 = vmul.f32 %v1740, %v1739
    %v1742 = vmul.f32 0.5, %v1741
    %v1743 = vsub.f32 1.5, %v1742
    %v1744 = vmul.f32 %v1739, %v1743
    %v1745 = vmul.f32 %v1689, %v1744
    %vm1746 = vcmp.eq.f32.partialorder %v1689, inf
    %v1747 = vsel %vm1746, %v1689, %v1745
    %vm1748 = vcmp.eq.f32.partialorder %v1689, 0.0
    %v1749 = vand.u32 %v1689, 2147483648
    %v1750 = vsel %vm1748, %v1749, %v1747
    %v1751 = vmul.f32 %v1702, 1.442695
    %v1752 = vpow.pop %v1751
    %v1753 = vmul.f32 %v1714, 1.442695
    %v1754 = vpow.pop %v1753
    %v1755 = vmul.f32 %v1726, 1.442695
    %v1756 = vpow.pop %v1755
    %v1757 = vmul.f32 %v1738, 1.442695
    %v1758 = vpow.pop %v1757
    %v1759 = vmul.f32 %v1750, 1.442695
    %v1760 = vpow.pop %v1759
    %v1761 = vadd.f32 %v1752, 1e-20
    %v1762 = vadd.f32 %v1754, 1e-20
    %v1763 = vadd.f32 %v1756, 1e-20
    %v1764 = vadd.f32 %v1758, 1e-20
    %v1765 = vadd.f32 %v1760, 1e-20
    %v1766 = vrcp.pop %v1761
    %v1767 = vrcp.pop %v1762
    %v1768 = vrcp.pop %v1763
    %v1769 = vrcp.pop %v1764
    %v1770 = vrcp.pop %v1765
    %v1771 = vsub.f32 1.0, %v1766
    %v1772 = vsub.f32 1.0, %v1767
    %v1773 = vsub.f32 1.0, %v1768
    %v1774 = vsub.f32 1.0, %v1769
    %v1775 = vsub.f32 1.0, %v1770
    %v1776 = vadd.f32 %v1702, 1e-20
    %v1777 = vadd.f32 %v1714, 1e-20
    %v1778 = vadd.f32 %v1726, 1e-20
    %v1779 = vadd.f32 %v1738, 1e-20
    %v1780 = vadd.f32 %v1750, 1e-20
    %v1781 = vrcp.pop %v1776
    %v1782 = vrcp.pop %v1777
    %v1783 = vrcp.pop %v1778
    %v1784 = vrcp.pop %v1779
    %v1785 = vrcp.pop %v1780
    %v1786 = vmul.f32 %v1633, %v1781
    %v1787 = vmul.f32 %v1634, %v1782
    %v1788 = vmul.f32 %v1635, %v1783
    %v1789 = vmul.f32 %v1636, %v1784
    %v1790 = vmul.f32 %v1637, %v1785
    %v1791 = vmul.f32 %v1771, %v1786
    %v1792 = vmul.f32 %v1772, %v1787
    %v1793 = vmul.f32 %v1773, %v1788
    %v1794 = vmul.f32 %v1774, %v1789
    %v1795 = vmul.f32 %v1775, %v1790
    %1796 = vst [vmem:[#allocation11] sm:$0xff] %v1791
    %1797 = vst [vmem:[#allocation11 + $0x8] sm:$0xff] %v1792
    %1798 = vst [vmem:[#allocation11 + $0x10] sm:$0xff] %v1793
    %1799 = vst [vmem:[#allocation11 + $0x18] sm:$0xff] %v1794
    %1800 = vst [vmem:[#allocation11 + $0x20] sm:$0xff] %v1795
    // Predicated region
    $region46: #{tpu_custom_call.1} parent=1 // pred_check
      _
    $region47: #{tpu_custom_call.1} parent=1 // pred_check_branch
      %1802 = sbr.rel (0) target = $region49
    $region48: #{tpu_custom_call.1} parent=1 // pred_region
      %1804 = vsyncadd [#allocation4], 0
      %s1805 = sshll.u32 [#allocation11], 4
      %s1806 = int_to_ptr.vmem [resolvable:$true] %s1805
      %s1807 = sshll.u32 %s6, 4
      %s1808 = int_to_ptr.hbm [resolvable:$true] %s1807
      %1813 = dma.vmem_to_hbm [thread:$0]  %s1806, 640, %s1808, [#allocation4], 128, 128, 8
    $region49: #{tpu_custom_call.1} parent=1 // pred_fallthru
      _
    // Predicated region
    $region50: #{tpu_custom_call.1} parent=1 // pred_check
      _
    $region51: #{tpu_custom_call.1} parent=1 // pred_check_branch
      %1815 = sbr.rel (0) target = $region53
    $region52: #{tpu_custom_call.1} parent=1 // pred_region
      %1817 = dma.done [#allocation4], 640
    $region53: #{tpu_custom_call.1} parent=1 // pred_fallthru
      _
    %1818 = vsyncpa [#allocation3], 1
    %1819 = vsyncpa [#allocation6], 1
    %1820 = vsyncpa [#allocation9], 1
    %1821 = vsyncpa [#allocation4], 1

</llo_original>
